<compile_context>
chip_gen: v6e
topology: v6e:2x2x1
jax: 0.10.0
libtpu: 0.0.40
codegen_flags: <defaults>
</compile_context>

<pallas_src>
import jax
import jax.numpy as jnp
import numpy as np
from jax.experimental import pallas as pl
from jax.experimental.pallas import tpu as pltpu


LIN_OUT = 1080          # Linear output features (from the PyTorch module)
LIN_PAD = 1152          # 9 * 128  — lane-dense padding for the MXU / stores


# ----------------------------- Pallas kernel --------------------------------
def rcnn_kernel(x_ref,        # (B, L0)          VMEM  (input, C=1 squeezed)
                cp_ref,       # (168,)           SMEM  packed conv w/scale/shift
                w12_ref,      # (cv4_out, 1152)  VMEM  fused linear weight
                b12_ref,      # (1, 1152)        VMEM  fused linear bias
                out_ref):     # (B, 1152)        VMEM

    def conv_bn_relu(chans, base, cout, k):
        # chans: python list of (B, Lin) arrays (one per input channel)
        cin = len(chans)
        lout = chans[0].shape[1] - k + 1
        # Hoist the shifted windows: computed once per layer, reused across
        # every output channel (previously re-sliced cout times).
        windows = [[chans[ci][:, kk:kk + lout] for kk in range(k)]
                   for ci in range(cin)]
        w_off = base
        s_off = base + cout * cin * k
        c_off = s_off + cout
        outs = []
        for co in range(cout):
            acc = None
            for ci in range(cin):
                for kk in range(k):
                    wv = cp_ref[w_off + co * cin * k + ci * k + kk]  # SMEM scalar
                    term = wv * windows[ci][kk]
                    acc = term if acc is None else acc + term
            # folded BatchNorm (eval) + ReLU
            acc = cp_ref[s_off + co] * acc + cp_ref[c_off + co]
            outs.append(jnp.maximum(acc, 0.0))
        return outs, c_off + cout

    chans = [x_ref[...]]                                  # layer input, C = 1
    base = 0
    chans, base = conv_bn_relu(chans, base, cout=3, k=3)  # layer_1 (AvgPool(1)=id)
    chans, base = conv_bn_relu(chans, base, cout=5, k=3)  # layer_2 (AvgPool(1)=id)
    chans, base = conv_bn_relu(chans, base, cout=3, k=5)  # layer_3
    chans, base = conv_bn_relu(chans, base, cout=1, k=5)  # layer_4 (Dropout=id)

    feat = chans[0]                                       # (B, cv4_out) == x.view(B, -1)
    # layer_5: both Linears fused offline into one (cv4_out, 1152) weight.
    y = jnp.dot(feat, w12_ref[...], preferred_element_type=jnp.float32) + b12_ref[...]
    out_ref[...] = y.astype(out_ref.dtype)


# ------------------------------- wrapper -------------------------------------
def rcnn_forward(x, conv_params, w12_pad, b12_pad):
    """x: (B, 1, input_size) float32, PyTorch NCW layout."""
    B = x.shape[0]
    x2d = x[:, 0, :]                                      # C == 1 -> (B, L0)

    vmem = pl.BlockSpec(memory_space=pltpu.MemorySpace.VMEM)
    smem = pl.BlockSpec(memory_space=pltpu.MemorySpace.SMEM)

    out_pad = pl.pallas_call(
        rcnn_kernel,
        out_shape=jax.ShapeDtypeStruct((B, LIN_PAD), jnp.float32),
        in_specs=[vmem, smem, vmem, vmem],
        out_specs=vmem,
    )(x2d, conv_params, w12_pad, b12_pad)
    return out_pad[:, :LIN_OUT]


# --------------------------- parameter creation -------------------------------
def make_params(key, input_size):
    eps = 1e-5
    conv_shapes = [(3, 1, 3), (5, 3, 3), (3, 5, 5), (1, 3, 5)]
    keys = jax.random.split(key, 4 * 4 + 4)

    raw = []        # raw (torch-layout) params for the pure-JAX reference
    conv_flat = []  # packed conv params for the Pallas kernel (SMEM)
    ki = 0
    for (cout, cin, k) in conv_shapes:
        bound = 1.0 / np.sqrt(cin * k)
        w = jax.random.uniform(keys[ki], (cout, cin, k), jnp.float32, -bound, bound); ki += 1
        b = jax.random.uniform(keys[ki], (cout,), jnp.float32, -bound, bound);        ki += 1
        gamma = 1.0 + 0.1 * jax.random.normal(keys[ki], (cout,), jnp.float32);        ki += 1
        beta = 0.1 * jax.random.normal(keys[ki], (cout,), jnp.float32);               ki += 1
        mean = jnp.zeros((cout,), jnp.float32)
        var = jnp.ones((cout,), jnp.float32)
        scale = gamma / jnp.sqrt(var + eps)
        shift = scale * (b - mean) + beta
        raw.append((w, b, gamma, beta, mean, var))
        conv_flat += [w.reshape(-1), scale, shift]
    conv_params = jnp.concatenate(conv_flat)              # (168,) packed SMEM array

    cv4_out = input_size - 12
    bound1 = 1.0 / np.sqrt(cv4_out)
    wlin1 = jax.random.uniform(keys[ki], (LIN_OUT, cv4_out), jnp.float32, -bound1, bound1); ki += 1
    blin1 = jax.random.uniform(keys[ki], (LIN_OUT,), jnp.float32, -bound1, bound1);         ki += 1
    bound2 = 1.0 / np.sqrt(LIN_OUT)
    wlin2 = jax.random.uniform(keys[ki], (LIN_OUT, LIN_OUT), jnp.float32, -bound2, bound2); ki += 1
    blin2 = jax.random.uniform(keys[ki], (LIN_OUT,), jnp.float32, -bound2, bound2);         ki += 1

    # Fuse the two Linear layers offline (no nonlinearity between them):
    #   y = (x @ W1.T + b1) @ W2.T + b2 = x @ (W1.T @ W2.T) + (b1 @ W2.T + b2)
    w12 = wlin1.T @ wlin2.T                                # (cv4_out, 1080)
    b12 = blin1 @ wlin2.T + blin2                          # (1080,)

    # Lane-pad 1080 -> 1152 (9*128) for dense MXU tiles / unmasked stores.
    w12_pad = jnp.zeros((cv4_out, LIN_PAD), jnp.float32).at[:, :LIN_OUT].set(w12)
    b12_pad = jnp.zeros((1, LIN_PAD), jnp.float32).at[:, :LIN_OUT].set(b12)

    raw_lin = (wlin1, blin1, wlin2, blin2)
    return conv_params, w12_pad, b12_pad, raw, raw_lin, eps


# ---------------------------- pure-JAX reference ------------------------------
def rcnn_reference(x, raw_conv, raw_lin, eps):
    def conv1d(h, w, b):
        y = jax.lax.conv_general_dilated(h, w, window_strides=(1,), padding='VALID',
                                         dimension_numbers=('NCH', 'OIH', 'NCH'))
        return y + b[None, :, None]

    h = x
    for (w, b, gamma, beta, mean, var) in raw_conv:
        h = conv1d(h, w, b)
        h = (h - mean[None, :, None]) / jnp.sqrt(var[None, :, None] + eps)
        h = gamma[None, :, None] * h + beta[None, :, None]
        h = jnp.maximum(h, 0.0)
    h = h.reshape(h.shape[0], -1)
    wlin1, blin1, wlin2, blin2 = raw_lin
    h = h @ wlin1.T + blin1
    h = h @ wlin2.T + blin2
    return h


# ----------------------------------- main --------------------------------------
if __name__ == "__main__":
    B = 2
    INPUT_SIZE = 28            # cv4_out = 28 - 2 - 2 - 4 - 4 = 16

    key = jax.random.PRNGKey(0)
    kx, kp = jax.random.split(key)
    x = jax.random.normal(kx, (B, 1, INPUT_SIZE), jnp.float32)

    conv_params, w12_pad, b12_pad, raw_conv, raw_lin, eps = make_params(kp, INPUT_SIZE)

    out = rcnn_forward(x, conv_params, w12_pad, b12_pad)
    out = jax.block_until_ready(out)

    ref = jax.block_until_ready(rcnn_reference(x, raw_conv, raw_lin, eps))

    assert out.shape == (B, LIN_OUT), out.shape
    np.testing.assert_allclose(np.asarray(out), np.asarray(ref), rtol=2e-2, atol=2e-2)
    print("KERNEL_OK")
</pallas_src>

<mosaic_0001>
module attributes {stable_mosaic.version = 11 : i64} {
  func.func @rcnn_kernel(%arg0: memref<2x28xf32, #tpu.memory_space<vmem>>, %arg1: memref<168xf32, #tpu.memory_space<smem>>, %arg2: memref<16x1152xf32, #tpu.memory_space<vmem>>, %arg3: memref<1x1152xf32, #tpu.memory_space<vmem>>, %arg4: memref<2x1152xf32, #tpu.memory_space<vmem>>) attributes {dimension_semantics = [], scalar_prefetch = 0 : i64, scratch_operands = 0 : i64, tpu.core_type = #tpu.core_type<tc>} {
    %c0 = arith.constant 0 : index
    %c0_0 = arith.constant 0 : index
    %0 = vector.load %arg0[%c0, %c0_0] : memref<2x28xf32, #tpu.memory_space<vmem>>, vector<2x28xf32>
    %1 = vector.extract_strided_slice %0 {offsets = [0, 0], sizes = [2, 26], strides = [1, 1]} : vector<2x28xf32> to vector<2x26xf32>
    %2 = vector.extract_strided_slice %0 {offsets = [0, 1], sizes = [2, 26], strides = [1, 1]} : vector<2x28xf32> to vector<2x26xf32>
    %3 = vector.extract_strided_slice %0 {offsets = [0, 2], sizes = [2, 26], strides = [1, 1]} : vector<2x28xf32> to vector<2x26xf32>
    %c0_1 = arith.constant 0 : index
    %4 = memref.load %arg1[%c0_1] : memref<168xf32, #tpu.memory_space<smem>>
    %5 = vector.broadcast %4 : f32 to vector<2x26xf32>
    %6 = arith.mulf %5, %1 : vector<2x26xf32>
    %c1 = arith.constant 1 : index
    %7 = memref.load %arg1[%c1] : memref<168xf32, #tpu.memory_space<smem>>
    %8 = vector.broadcast %7 : f32 to vector<2x26xf32>
    %9 = arith.mulf %8, %2 : vector<2x26xf32>
    %10 = arith.addf %6, %9 : vector<2x26xf32>
    %c2 = arith.constant 2 : index
    %11 = memref.load %arg1[%c2] : memref<168xf32, #tpu.memory_space<smem>>
    %12 = vector.broadcast %11 : f32 to vector<2x26xf32>
    %13 = arith.mulf %12, %3 : vector<2x26xf32>
    %14 = arith.addf %10, %13 : vector<2x26xf32>
    %c9 = arith.constant 9 : index
    %15 = memref.load %arg1[%c9] : memref<168xf32, #tpu.memory_space<smem>>
    %16 = vector.broadcast %15 : f32 to vector<2x26xf32>
    %17 = arith.mulf %16, %14 : vector<2x26xf32>
    %c12 = arith.constant 12 : index
    %18 = memref.load %arg1[%c12] : memref<168xf32, #tpu.memory_space<smem>>
    %19 = vector.broadcast %18 : f32 to vector<2x26xf32>
    %20 = arith.addf %17, %19 : vector<2x26xf32>
    %cst = arith.constant 0.000000e+00 : f32
    %21 = vector.broadcast %cst : f32 to vector<2x26xf32>
    %22 = arith.maximumf %20, %21 : vector<2x26xf32>
    %c3 = arith.constant 3 : index
    %23 = memref.load %arg1[%c3] : memref<168xf32, #tpu.memory_space<smem>>
    %24 = vector.broadcast %23 : f32 to vector<2x26xf32>
    %25 = arith.mulf %24, %1 : vector<2x26xf32>
    %c4 = arith.constant 4 : index
    %26 = memref.load %arg1[%c4] : memref<168xf32, #tpu.memory_space<smem>>
    %27 = vector.broadcast %26 : f32 to vector<2x26xf32>
    %28 = arith.mulf %27, %2 : vector<2x26xf32>
    %29 = arith.addf %25, %28 : vector<2x26xf32>
    %c5 = arith.constant 5 : index
    %30 = memref.load %arg1[%c5] : memref<168xf32, #tpu.memory_space<smem>>
    %31 = vector.broadcast %30 : f32 to vector<2x26xf32>
    %32 = arith.mulf %31, %3 : vector<2x26xf32>
    %33 = arith.addf %29, %32 : vector<2x26xf32>
    %c10 = arith.constant 10 : index
    %34 = memref.load %arg1[%c10] : memref<168xf32, #tpu.memory_space<smem>>
    %35 = vector.broadcast %34 : f32 to vector<2x26xf32>
    %36 = arith.mulf %35, %33 : vector<2x26xf32>
    %c13 = arith.constant 13 : index
    %37 = memref.load %arg1[%c13] : memref<168xf32, #tpu.memory_space<smem>>
    %38 = vector.broadcast %37 : f32 to vector<2x26xf32>
    %39 = arith.addf %36, %38 : vector<2x26xf32>
    %cst_2 = arith.constant 0.000000e+00 : f32
    %40 = vector.broadcast %cst_2 : f32 to vector<2x26xf32>
    %41 = arith.maximumf %39, %40 : vector<2x26xf32>
    %c6 = arith.constant 6 : index
    %42 = memref.load %arg1[%c6] : memref<168xf32, #tpu.memory_space<smem>>
    %43 = vector.broadcast %42 : f32 to vector<2x26xf32>
    %44 = arith.mulf %43, %1 : vector<2x26xf32>
    %c7 = arith.constant 7 : index
    %45 = memref.load %arg1[%c7] : memref<168xf32, #tpu.memory_space<smem>>
    %46 = vector.broadcast %45 : f32 to vector<2x26xf32>
    %47 = arith.mulf %46, %2 : vector<2x26xf32>
    %48 = arith.addf %44, %47 : vector<2x26xf32>
    %c8 = arith.constant 8 : index
    %49 = memref.load %arg1[%c8] : memref<168xf32, #tpu.memory_space<smem>>
    %50 = vector.broadcast %49 : f32 to vector<2x26xf32>
    %51 = arith.mulf %50, %3 : vector<2x26xf32>
    %52 = arith.addf %48, %51 : vector<2x26xf32>
    %c11 = arith.constant 11 : index
    %53 = memref.load %arg1[%c11] : memref<168xf32, #tpu.memory_space<smem>>
    %54 = vector.broadcast %53 : f32 to vector<2x26xf32>
    %55 = arith.mulf %54, %52 : vector<2x26xf32>
    %c14 = arith.constant 14 : index
    %56 = memref.load %arg1[%c14] : memref<168xf32, #tpu.memory_space<smem>>
    %57 = vector.broadcast %56 : f32 to vector<2x26xf32>
    %58 = arith.addf %55, %57 : vector<2x26xf32>
    %cst_3 = arith.constant 0.000000e+00 : f32
    %59 = vector.broadcast %cst_3 : f32 to vector<2x26xf32>
    %60 = arith.maximumf %58, %59 : vector<2x26xf32>
    %61 = vector.extract_strided_slice %22 {offsets = [0, 0], sizes = [2, 24], strides = [1, 1]} : vector<2x26xf32> to vector<2x24xf32>
    %62 = vector.extract_strided_slice %22 {offsets = [0, 1], sizes = [2, 24], strides = [1, 1]} : vector<2x26xf32> to vector<2x24xf32>
    %63 = vector.extract_strided_slice %22 {offsets = [0, 2], sizes = [2, 24], strides = [1, 1]} : vector<2x26xf32> to vector<2x24xf32>
    %64 = vector.extract_strided_slice %41 {offsets = [0, 0], sizes = [2, 24], strides = [1, 1]} : vector<2x26xf32> to vector<2x24xf32>
    %65 = vector.extract_strided_slice %41 {offsets = [0, 1], sizes = [2, 24], strides = [1, 1]} : vector<2x26xf32> to vector<2x24xf32>
    %66 = vector.extract_strided_slice %41 {offsets = [0, 2], sizes = [2, 24], strides = [1, 1]} : vector<2x26xf32> to vector<2x24xf32>
    %67 = vector.extract_strided_slice %60 {offsets = [0, 0], sizes = [2, 24], strides = [1, 1]} : vector<2x26xf32> to vector<2x24xf32>
    %68 = vector.extract_strided_slice %60 {offsets = [0, 1], sizes = [2, 24], strides = [1, 1]} : vector<2x26xf32> to vector<2x24xf32>
    %69 = vector.extract_strided_slice %60 {offsets = [0, 2], sizes = [2, 24], strides = [1, 1]} : vector<2x26xf32> to vector<2x24xf32>
    %c15 = arith.constant 15 : index
    %70 = memref.load %arg1[%c15] : memref<168xf32, #tpu.memory_space<smem>>
    %71 = vector.broadcast %70 : f32 to vector<2x24xf32>
    %72 = arith.mulf %71, %61 : vector<2x24xf32>
    %c16 = arith.constant 16 : index
    %73 = memref.load %arg1[%c16] : memref<168xf32, #tpu.memory_space<smem>>
    %74 = vector.broadcast %73 : f32 to vector<2x24xf32>
    %75 = arith.mulf %74, %62 : vector<2x24xf32>
    %76 = arith.addf %72, %75 : vector<2x24xf32>
    %c17 = arith.constant 17 : index
    %77 = memref.load %arg1[%c17] : memref<168xf32, #tpu.memory_space<smem>>
    %78 = vector.broadcast %77 : f32 to vector<2x24xf32>
    %79 = arith.mulf %78, %63 : vector<2x24xf32>
    %80 = arith.addf %76, %79 : vector<2x24xf32>
    %c18 = arith.constant 18 : index
    %81 = memref.load %arg1[%c18] : memref<168xf32, #tpu.memory_space<smem>>
    %82 = vector.broadcast %81 : f32 to vector<2x24xf32>
    %83 = arith.mulf %82, %64 : vector<2x24xf32>
    %84 = arith.addf %80, %83 : vector<2x24xf32>
    %c19 = arith.constant 19 : index
    %85 = memref.load %arg1[%c19] : memref<168xf32, #tpu.memory_space<smem>>
    %86 = vector.broadcast %85 : f32 to vector<2x24xf32>
    %87 = arith.mulf %86, %65 : vector<2x24xf32>
    %88 = arith.addf %84, %87 : vector<2x24xf32>
    %c20 = arith.constant 20 : index
    %89 = memref.load %arg1[%c20] : memref<168xf32, #tpu.memory_space<smem>>
    %90 = vector.broadcast %89 : f32 to vector<2x24xf32>
    %91 = arith.mulf %90, %66 : vector<2x24xf32>
    %92 = arith.addf %88, %91 : vector<2x24xf32>
    %c21 = arith.constant 21 : index
    %93 = memref.load %arg1[%c21] : memref<168xf32, #tpu.memory_space<smem>>
    %94 = vector.broadcast %93 : f32 to vector<2x24xf32>
    %95 = arith.mulf %94, %67 : vector<2x24xf32>
    %96 = arith.addf %92, %95 : vector<2x24xf32>
    %c22 = arith.constant 22 : index
    %97 = memref.load %arg1[%c22] : memref<168xf32, #tpu.memory_space<smem>>
    %98 = vector.broadcast %97 : f32 to vector<2x24xf32>
    %99 = arith.mulf %98, %68 : vector<2x24xf32>
    %100 = arith.addf %96, %99 : vector<2x24xf32>
    %c23 = arith.constant 23 : index
    %101 = memref.load %arg1[%c23] : memref<168xf32, #tpu.memory_space<smem>>
    %102 = vector.broadcast %101 : f32 to vector<2x24xf32>
    %103 = arith.mulf %102, %69 : vector<2x24xf32>
    %104 = arith.addf %100, %103 : vector<2x24xf32>
    %c60 = arith.constant 60 : index
    %105 = memref.load %arg1[%c60] : memref<168xf32, #tpu.memory_space<smem>>
    %106 = vector.broadcast %105 : f32 to vector<2x24xf32>
    %107 = arith.mulf %106, %104 : vector<2x24xf32>
    %c65 = arith.constant 65 : index
    %108 = memref.load %arg1[%c65] : memref<168xf32, #tpu.memory_space<smem>>
    %109 = vector.broadcast %108 : f32 to vector<2x24xf32>
    %110 = arith.addf %107, %109 : vector<2x24xf32>
    %cst_4 = arith.constant 0.000000e+00 : f32
    %111 = vector.broadcast %cst_4 : f32 to vector<2x24xf32>
    %112 = arith.maximumf %110, %111 : vector<2x24xf32>
    %c24 = arith.constant 24 : index
    %113 = memref.load %arg1[%c24] : memref<168xf32, #tpu.memory_space<smem>>
    %114 = vector.broadcast %113 : f32 to vector<2x24xf32>
    %115 = arith.mulf %114, %61 : vector<2x24xf32>
    %c25 = arith.constant 25 : index
    %116 = memref.load %arg1[%c25] : memref<168xf32, #tpu.memory_space<smem>>
    %117 = vector.broadcast %116 : f32 to vector<2x24xf32>
    %118 = arith.mulf %117, %62 : vector<2x24xf32>
    %119 = arith.addf %115, %118 : vector<2x24xf32>
    %c26 = arith.constant 26 : index
    %120 = memref.load %arg1[%c26] : memref<168xf32, #tpu.memory_space<smem>>
    %121 = vector.broadcast %120 : f32 to vector<2x24xf32>
    %122 = arith.mulf %121, %63 : vector<2x24xf32>
    %123 = arith.addf %119, %122 : vector<2x24xf32>
    %c27 = arith.constant 27 : index
    %124 = memref.load %arg1[%c27] : memref<168xf32, #tpu.memory_space<smem>>
    %125 = vector.broadcast %124 : f32 to vector<2x24xf32>
    %126 = arith.mulf %125, %64 : vector<2x24xf32>
    %127 = arith.addf %123, %126 : vector<2x24xf32>
    %c28 = arith.constant 28 : index
    %128 = memref.load %arg1[%c28] : memref<168xf32, #tpu.memory_space<smem>>
    %129 = vector.broadcast %128 : f32 to vector<2x24xf32>
    %130 = arith.mulf %129, %65 : vector<2x24xf32>
    %131 = arith.addf %127, %130 : vector<2x24xf32>
    %c29 = arith.constant 29 : index
    %132 = memref.load %arg1[%c29] : memref<168xf32, #tpu.memory_space<smem>>
    %133 = vector.broadcast %132 : f32 to vector<2x24xf32>
    %134 = arith.mulf %133, %66 : vector<2x24xf32>
    %135 = arith.addf %131, %134 : vector<2x24xf32>
    %c30 = arith.constant 30 : index
    %136 = memref.load %arg1[%c30] : memref<168xf32, #tpu.memory_space<smem>>
    %137 = vector.broadcast %136 : f32 to vector<2x24xf32>
    %138 = arith.mulf %137, %67 : vector<2x24xf32>
    %139 = arith.addf %135, %138 : vector<2x24xf32>
    %c31 = arith.constant 31 : index
    %140 = memref.load %arg1[%c31] : memref<168xf32, #tpu.memory_space<smem>>
    %141 = vector.broadcast %140 : f32 to vector<2x24xf32>
    %142 = arith.mulf %141, %68 : vector<2x24xf32>
    %143 = arith.addf %139, %142 : vector<2x24xf32>
    %c32 = arith.constant 32 : index
    %144 = memref.load %arg1[%c32] : memref<168xf32, #tpu.memory_space<smem>>
    %145 = vector.broadcast %144 : f32 to vector<2x24xf32>
    %146 = arith.mulf %145, %69 : vector<2x24xf32>
    %147 = arith.addf %143, %146 : vector<2x24xf32>
    %c61 = arith.constant 61 : index
    %148 = memref.load %arg1[%c61] : memref<168xf32, #tpu.memory_space<smem>>
    %149 = vector.broadcast %148 : f32 to vector<2x24xf32>
    %150 = arith.mulf %149, %147 : vector<2x24xf32>
    %c66 = arith.constant 66 : index
    %151 = memref.load %arg1[%c66] : memref<168xf32, #tpu.memory_space<smem>>
    %152 = vector.broadcast %151 : f32 to vector<2x24xf32>
    %153 = arith.addf %150, %152 : vector<2x24xf32>
    %cst_5 = arith.constant 0.000000e+00 : f32
    %154 = vector.broadcast %cst_5 : f32 to vector<2x24xf32>
    %155 = arith.maximumf %153, %154 : vector<2x24xf32>
    %c33 = arith.constant 33 : index
    %156 = memref.load %arg1[%c33] : memref<168xf32, #tpu.memory_space<smem>>
    %157 = vector.broadcast %156 : f32 to vector<2x24xf32>
    %158 = arith.mulf %157, %61 : vector<2x24xf32>
    %c34 = arith.constant 34 : index
    %159 = memref.load %arg1[%c34] : memref<168xf32, #tpu.memory_space<smem>>
    %160 = vector.broadcast %159 : f32 to vector<2x24xf32>
    %161 = arith.mulf %160, %62 : vector<2x24xf32>
    %162 = arith.addf %158, %161 : vector<2x24xf32>
    %c35 = arith.constant 35 : index
    %163 = memref.load %arg1[%c35] : memref<168xf32, #tpu.memory_space<smem>>
    %164 = vector.broadcast %163 : f32 to vector<2x24xf32>
    %165 = arith.mulf %164, %63 : vector<2x24xf32>
    %166 = arith.addf %162, %165 : vector<2x24xf32>
    %c36 = arith.constant 36 : index
    %167 = memref.load %arg1[%c36] : memref<168xf32, #tpu.memory_space<smem>>
    %168 = vector.broadcast %167 : f32 to vector<2x24xf32>
    %169 = arith.mulf %168, %64 : vector<2x24xf32>
    %170 = arith.addf %166, %169 : vector<2x24xf32>
    %c37 = arith.constant 37 : index
    %171 = memref.load %arg1[%c37] : memref<168xf32, #tpu.memory_space<smem>>
    %172 = vector.broadcast %171 : f32 to vector<2x24xf32>
    %173 = arith.mulf %172, %65 : vector<2x24xf32>
    %174 = arith.addf %170, %173 : vector<2x24xf32>
    %c38 = arith.constant 38 : index
    %175 = memref.load %arg1[%c38] : memref<168xf32, #tpu.memory_space<smem>>
    %176 = vector.broadcast %175 : f32 to vector<2x24xf32>
    %177 = arith.mulf %176, %66 : vector<2x24xf32>
    %178 = arith.addf %174, %177 : vector<2x24xf32>
    %c39 = arith.constant 39 : index
    %179 = memref.load %arg1[%c39] : memref<168xf32, #tpu.memory_space<smem>>
    %180 = vector.broadcast %179 : f32 to vector<2x24xf32>
    %181 = arith.mulf %180, %67 : vector<2x24xf32>
    %182 = arith.addf %178, %181 : vector<2x24xf32>
    %c40 = arith.constant 40 : index
    %183 = memref.load %arg1[%c40] : memref<168xf32, #tpu.memory_space<smem>>
    %184 = vector.broadcast %183 : f32 to vector<2x24xf32>
    %185 = arith.mulf %184, %68 : vector<2x24xf32>
    %186 = arith.addf %182, %185 : vector<2x24xf32>
    %c41 = arith.constant 41 : index
    %187 = memref.load %arg1[%c41] : memref<168xf32, #tpu.memory_space<smem>>
    %188 = vector.broadcast %187 : f32 to vector<2x24xf32>
    %189 = arith.mulf %188, %69 : vector<2x24xf32>
    %190 = arith.addf %186, %189 : vector<2x24xf32>
    %c62 = arith.constant 62 : index
    %191 = memref.load %arg1[%c62] : memref<168xf32, #tpu.memory_space<smem>>
    %192 = vector.broadcast %191 : f32 to vector<2x24xf32>
    %193 = arith.mulf %192, %190 : vector<2x24xf32>
    %c67 = arith.constant 67 : index
    %194 = memref.load %arg1[%c67] : memref<168xf32, #tpu.memory_space<smem>>
    %195 = vector.broadcast %194 : f32 to vector<2x24xf32>
    %196 = arith.addf %193, %195 : vector<2x24xf32>
    %cst_6 = arith.constant 0.000000e+00 : f32
    %197 = vector.broadcast %cst_6 : f32 to vector<2x24xf32>
    %198 = arith.maximumf %196, %197 : vector<2x24xf32>
    %c42 = arith.constant 42 : index
    %199 = memref.load %arg1[%c42] : memref<168xf32, #tpu.memory_space<smem>>
    %200 = vector.broadcast %199 : f32 to vector<2x24xf32>
    %201 = arith.mulf %200, %61 : vector<2x24xf32>
    %c43 = arith.constant 43 : index
    %202 = memref.load %arg1[%c43] : memref<168xf32, #tpu.memory_space<smem>>
    %203 = vector.broadcast %202 : f32 to vector<2x24xf32>
    %204 = arith.mulf %203, %62 : vector<2x24xf32>
    %205 = arith.addf %201, %204 : vector<2x24xf32>
    %c44 = arith.constant 44 : index
    %206 = memref.load %arg1[%c44] : memref<168xf32, #tpu.memory_space<smem>>
    %207 = vector.broadcast %206 : f32 to vector<2x24xf32>
    %208 = arith.mulf %207, %63 : vector<2x24xf32>
    %209 = arith.addf %205, %208 : vector<2x24xf32>
    %c45 = arith.constant 45 : index
    %210 = memref.load %arg1[%c45] : memref<168xf32, #tpu.memory_space<smem>>
    %211 = vector.broadcast %210 : f32 to vector<2x24xf32>
    %212 = arith.mulf %211, %64 : vector<2x24xf32>
    %213 = arith.addf %209, %212 : vector<2x24xf32>
    %c46 = arith.constant 46 : index
    %214 = memref.load %arg1[%c46] : memref<168xf32, #tpu.memory_space<smem>>
    %215 = vector.broadcast %214 : f32 to vector<2x24xf32>
    %216 = arith.mulf %215, %65 : vector<2x24xf32>
    %217 = arith.addf %213, %216 : vector<2x24xf32>
    %c47 = arith.constant 47 : index
    %218 = memref.load %arg1[%c47] : memref<168xf32, #tpu.memory_space<smem>>
    %219 = vector.broadcast %218 : f32 to vector<2x24xf32>
    %220 = arith.mulf %219, %66 : vector<2x24xf32>
    %221 = arith.addf %217, %220 : vector<2x24xf32>
    %c48 = arith.constant 48 : index
    %222 = memref.load %arg1[%c48] : memref<168xf32, #tpu.memory_space<smem>>
    %223 = vector.broadcast %222 : f32 to vector<2x24xf32>
    %224 = arith.mulf %223, %67 : vector<2x24xf32>
    %225 = arith.addf %221, %224 : vector<2x24xf32>
    %c49 = arith.constant 49 : index
    %226 = memref.load %arg1[%c49] : memref<168xf32, #tpu.memory_space<smem>>
    %227 = vector.broadcast %226 : f32 to vector<2x24xf32>
    %228 = arith.mulf %227, %68 : vector<2x24xf32>
    %229 = arith.addf %225, %228 : vector<2x24xf32>
    %c50 = arith.constant 50 : index
    %230 = memref.load %arg1[%c50] : memref<168xf32, #tpu.memory_space<smem>>
    %231 = vector.broadcast %230 : f32 to vector<2x24xf32>
    %232 = arith.mulf %231, %69 : vector<2x24xf32>
    %233 = arith.addf %229, %232 : vector<2x24xf32>
    %c63 = arith.constant 63 : index
    %234 = memref.load %arg1[%c63] : memref<168xf32, #tpu.memory_space<smem>>
    %235 = vector.broadcast %234 : f32 to vector<2x24xf32>
    %236 = arith.mulf %235, %233 : vector<2x24xf32>
    %c68 = arith.constant 68 : index
    %237 = memref.load %arg1[%c68] : memref<168xf32, #tpu.memory_space<smem>>
    %238 = vector.broadcast %237 : f32 to vector<2x24xf32>
    %239 = arith.addf %236, %238 : vector<2x24xf32>
    %cst_7 = arith.constant 0.000000e+00 : f32
    %240 = vector.broadcast %cst_7 : f32 to vector<2x24xf32>
    %241 = arith.maximumf %239, %240 : vector<2x24xf32>
    %c51 = arith.constant 51 : index
    %242 = memref.load %arg1[%c51] : memref<168xf32, #tpu.memory_space<smem>>
    %243 = vector.broadcast %242 : f32 to vector<2x24xf32>
    %244 = arith.mulf %243, %61 : vector<2x24xf32>
    %c52 = arith.constant 52 : index
    %245 = memref.load %arg1[%c52] : memref<168xf32, #tpu.memory_space<smem>>
    %246 = vector.broadcast %245 : f32 to vector<2x24xf32>
    %247 = arith.mulf %246, %62 : vector<2x24xf32>
    %248 = arith.addf %244, %247 : vector<2x24xf32>
    %c53 = arith.constant 53 : index
    %249 = memref.load %arg1[%c53] : memref<168xf32, #tpu.memory_space<smem>>
    %250 = vector.broadcast %249 : f32 to vector<2x24xf32>
    %251 = arith.mulf %250, %63 : vector<2x24xf32>
    %252 = arith.addf %248, %251 : vector<2x24xf32>
    %c54 = arith.constant 54 : index
    %253 = memref.load %arg1[%c54] : memref<168xf32, #tpu.memory_space<smem>>
    %254 = vector.broadcast %253 : f32 to vector<2x24xf32>
    %255 = arith.mulf %254, %64 : vector<2x24xf32>
    %256 = arith.addf %252, %255 : vector<2x24xf32>
    %c55 = arith.constant 55 : index
    %257 = memref.load %arg1[%c55] : memref<168xf32, #tpu.memory_space<smem>>
    %258 = vector.broadcast %257 : f32 to vector<2x24xf32>
    %259 = arith.mulf %258, %65 : vector<2x24xf32>
    %260 = arith.addf %256, %259 : vector<2x24xf32>
    %c56 = arith.constant 56 : index
    %261 = memref.load %arg1[%c56] : memref<168xf32, #tpu.memory_space<smem>>
    %262 = vector.broadcast %261 : f32 to vector<2x24xf32>
    %263 = arith.mulf %262, %66 : vector<2x24xf32>
    %264 = arith.addf %260, %263 : vector<2x24xf32>
    %c57 = arith.constant 57 : index
    %265 = memref.load %arg1[%c57] : memref<168xf32, #tpu.memory_space<smem>>
    %266 = vector.broadcast %265 : f32 to vector<2x24xf32>
    %267 = arith.mulf %266, %67 : vector<2x24xf32>
    %268 = arith.addf %264, %267 : vector<2x24xf32>
    %c58 = arith.constant 58 : index
    %269 = memref.load %arg1[%c58] : memref<168xf32, #tpu.memory_space<smem>>
    %270 = vector.broadcast %269 : f32 to vector<2x24xf32>
    %271 = arith.mulf %270, %68 : vector<2x24xf32>
    %272 = arith.addf %268, %271 : vector<2x24xf32>
    %c59 = arith.constant 59 : index
    %273 = memref.load %arg1[%c59] : memref<168xf32, #tpu.memory_space<smem>>
    %274 = vector.broadcast %273 : f32 to vector<2x24xf32>
    %275 = arith.mulf %274, %69 : vector<2x24xf32>
    %276 = arith.addf %272, %275 : vector<2x24xf32>
    %c64 = arith.constant 64 : index
    %277 = memref.load %arg1[%c64] : memref<168xf32, #tpu.memory_space<smem>>
    %278 = vector.broadcast %277 : f32 to vector<2x24xf32>
    %279 = arith.mulf %278, %276 : vector<2x24xf32>
    %c69 = arith.constant 69 : index
    %280 = memref.load %arg1[%c69] : memref<168xf32, #tpu.memory_space<smem>>
    %281 = vector.broadcast %280 : f32 to vector<2x24xf32>
    %282 = arith.addf %279, %281 : vector<2x24xf32>
    %cst_8 = arith.constant 0.000000e+00 : f32
    %283 = vector.broadcast %cst_8 : f32 to vector<2x24xf32>
    %284 = arith.maximumf %282, %283 : vector<2x24xf32>
    %285 = vector.extract_strided_slice %112 {offsets = [0, 0], sizes = [2, 20], strides = [1, 1]} : vector<2x24xf32> to vector<2x20xf32>
    %286 = vector.extract_strided_slice %112 {offsets = [0, 1], sizes = [2, 20], strides = [1, 1]} : vector<2x24xf32> to vector<2x20xf32>
    %287 = vector.extract_strided_slice %112 {offsets = [0, 2], sizes = [2, 20], strides = [1, 1]} : vector<2x24xf32> to vector<2x20xf32>
    %288 = vector.extract_strided_slice %112 {offsets = [0, 3], sizes = [2, 20], strides = [1, 1]} : vector<2x24xf32> to vector<2x20xf32>
    %289 = vector.extract_strided_slice %112 {offsets = [0, 4], sizes = [2, 20], strides = [1, 1]} : vector<2x24xf32> to vector<2x20xf32>
    %290 = vector.extract_strided_slice %155 {offsets = [0, 0], sizes = [2, 20], strides = [1, 1]} : vector<2x24xf32> to vector<2x20xf32>
    %291 = vector.extract_strided_slice %155 {offsets = [0, 1], sizes = [2, 20], strides = [1, 1]} : vector<2x24xf32> to vector<2x20xf32>
    %292 = vector.extract_strided_slice %155 {offsets = [0, 2], sizes = [2, 20], strides = [1, 1]} : vector<2x24xf32> to vector<2x20xf32>
    %293 = vector.extract_strided_slice %155 {offsets = [0, 3], sizes = [2, 20], strides = [1, 1]} : vector<2x24xf32> to vector<2x20xf32>
    %294 = vector.extract_strided_slice %155 {offsets = [0, 4], sizes = [2, 20], strides = [1, 1]} : vector<2x24xf32> to vector<2x20xf32>
    %295 = vector.extract_strided_slice %198 {offsets = [0, 0], sizes = [2, 20], strides = [1, 1]} : vector<2x24xf32> to vector<2x20xf32>
    %296 = vector.extract_strided_slice %198 {offsets = [0, 1], sizes = [2, 20], strides = [1, 1]} : vector<2x24xf32> to vector<2x20xf32>
    %297 = vector.extract_strided_slice %198 {offsets = [0, 2], sizes = [2, 20], strides = [1, 1]} : vector<2x24xf32> to vector<2x20xf32>
    %298 = vector.extract_strided_slice %198 {offsets = [0, 3], sizes = [2, 20], strides = [1, 1]} : vector<2x24xf32> to vector<2x20xf32>
    %299 = vector.extract_strided_slice %198 {offsets = [0, 4], sizes = [2, 20], strides = [1, 1]} : vector<2x24xf32> to vector<2x20xf32>
    %300 = vector.extract_strided_slice %241 {offsets = [0, 0], sizes = [2, 20], strides = [1, 1]} : vector<2x24xf32> to vector<2x20xf32>
    %301 = vector.extract_strided_slice %241 {offsets = [0, 1], sizes = [2, 20], strides = [1, 1]} : vector<2x24xf32> to vector<2x20xf32>
    %302 = vector.extract_strided_slice %241 {offsets = [0, 2], sizes = [2, 20], strides = [1, 1]} : vector<2x24xf32> to vector<2x20xf32>
    %303 = vector.extract_strided_slice %241 {offsets = [0, 3], sizes = [2, 20], strides = [1, 1]} : vector<2x24xf32> to vector<2x20xf32>
    %304 = vector.extract_strided_slice %241 {offsets = [0, 4], sizes = [2, 20], strides = [1, 1]} : vector<2x24xf32> to vector<2x20xf32>
    %305 = vector.extract_strided_slice %284 {offsets = [0, 0], sizes = [2, 20], strides = [1, 1]} : vector<2x24xf32> to vector<2x20xf32>
    %306 = vector.extract_strided_slice %284 {offsets = [0, 1], sizes = [2, 20], strides = [1, 1]} : vector<2x24xf32> to vector<2x20xf32>
    %307 = vector.extract_strided_slice %284 {offsets = [0, 2], sizes = [2, 20], strides = [1, 1]} : vector<2x24xf32> to vector<2x20xf32>
    %308 = vector.extract_strided_slice %284 {offsets = [0, 3], sizes = [2, 20], strides = [1, 1]} : vector<2x24xf32> to vector<2x20xf32>
    %309 = vector.extract_strided_slice %284 {offsets = [0, 4], sizes = [2, 20], strides = [1, 1]} : vector<2x24xf32> to vector<2x20xf32>
    %c70 = arith.constant 70 : index
    %310 = memref.load %arg1[%c70] : memref<168xf32, #tpu.memory_space<smem>>
    %311 = vector.broadcast %310 : f32 to vector<2x20xf32>
    %312 = arith.mulf %311, %285 : vector<2x20xf32>
    %c71 = arith.constant 71 : index
    %313 = memref.load %arg1[%c71] : memref<168xf32, #tpu.memory_space<smem>>
    %314 = vector.broadcast %313 : f32 to vector<2x20xf32>
    %315 = arith.mulf %314, %286 : vector<2x20xf32>
    %316 = arith.addf %312, %315 : vector<2x20xf32>
    %c72 = arith.constant 72 : index
    %317 = memref.load %arg1[%c72] : memref<168xf32, #tpu.memory_space<smem>>
    %318 = vector.broadcast %317 : f32 to vector<2x20xf32>
    %319 = arith.mulf %318, %287 : vector<2x20xf32>
    %320 = arith.addf %316, %319 : vector<2x20xf32>
    %c73 = arith.constant 73 : index
    %321 = memref.load %arg1[%c73] : memref<168xf32, #tpu.memory_space<smem>>
    %322 = vector.broadcast %321 : f32 to vector<2x20xf32>
    %323 = arith.mulf %322, %288 : vector<2x20xf32>
    %324 = arith.addf %320, %323 : vector<2x20xf32>
    %c74 = arith.constant 74 : index
    %325 = memref.load %arg1[%c74] : memref<168xf32, #tpu.memory_space<smem>>
    %326 = vector.broadcast %325 : f32 to vector<2x20xf32>
    %327 = arith.mulf %326, %289 : vector<2x20xf32>
    %328 = arith.addf %324, %327 : vector<2x20xf32>
    %c75 = arith.constant 75 : index
    %329 = memref.load %arg1[%c75] : memref<168xf32, #tpu.memory_space<smem>>
    %330 = vector.broadcast %329 : f32 to vector<2x20xf32>
    %331 = arith.mulf %330, %290 : vector<2x20xf32>
    %332 = arith.addf %328, %331 : vector<2x20xf32>
    %c76 = arith.constant 76 : index
    %333 = memref.load %arg1[%c76] : memref<168xf32, #tpu.memory_space<smem>>
    %334 = vector.broadcast %333 : f32 to vector<2x20xf32>
    %335 = arith.mulf %334, %291 : vector<2x20xf32>
    %336 = arith.addf %332, %335 : vector<2x20xf32>
    %c77 = arith.constant 77 : index
    %337 = memref.load %arg1[%c77] : memref<168xf32, #tpu.memory_space<smem>>
    %338 = vector.broadcast %337 : f32 to vector<2x20xf32>
    %339 = arith.mulf %338, %292 : vector<2x20xf32>
    %340 = arith.addf %336, %339 : vector<2x20xf32>
    %c78 = arith.constant 78 : index
    %341 = memref.load %arg1[%c78] : memref<168xf32, #tpu.memory_space<smem>>
    %342 = vector.broadcast %341 : f32 to vector<2x20xf32>
    %343 = arith.mulf %342, %293 : vector<2x20xf32>
    %344 = arith.addf %340, %343 : vector<2x20xf32>
    %c79 = arith.constant 79 : index
    %345 = memref.load %arg1[%c79] : memref<168xf32, #tpu.memory_space<smem>>
    %346 = vector.broadcast %345 : f32 to vector<2x20xf32>
    %347 = arith.mulf %346, %294 : vector<2x20xf32>
    %348 = arith.addf %344, %347 : vector<2x20xf32>
    %c80 = arith.constant 80 : index
    %349 = memref.load %arg1[%c80] : memref<168xf32, #tpu.memory_space<smem>>
    %350 = vector.broadcast %349 : f32 to vector<2x20xf32>
    %351 = arith.mulf %350, %295 : vector<2x20xf32>
    %352 = arith.addf %348, %351 : vector<2x20xf32>
    %c81 = arith.constant 81 : index
    %353 = memref.load %arg1[%c81] : memref<168xf32, #tpu.memory_space<smem>>
    %354 = vector.broadcast %353 : f32 to vector<2x20xf32>
    %355 = arith.mulf %354, %296 : vector<2x20xf32>
    %356 = arith.addf %352, %355 : vector<2x20xf32>
    %c82 = arith.constant 82 : index
    %357 = memref.load %arg1[%c82] : memref<168xf32, #tpu.memory_space<smem>>
    %358 = vector.broadcast %357 : f32 to vector<2x20xf32>
    %359 = arith.mulf %358, %297 : vector<2x20xf32>
    %360 = arith.addf %356, %359 : vector<2x20xf32>
    %c83 = arith.constant 83 : index
    %361 = memref.load %arg1[%c83] : memref<168xf32, #tpu.memory_space<smem>>
    %362 = vector.broadcast %361 : f32 to vector<2x20xf32>
    %363 = arith.mulf %362, %298 : vector<2x20xf32>
    %364 = arith.addf %360, %363 : vector<2x20xf32>
    %c84 = arith.constant 84 : index
    %365 = memref.load %arg1[%c84] : memref<168xf32, #tpu.memory_space<smem>>
    %366 = vector.broadcast %365 : f32 to vector<2x20xf32>
    %367 = arith.mulf %366, %299 : vector<2x20xf32>
    %368 = arith.addf %364, %367 : vector<2x20xf32>
    %c85 = arith.constant 85 : index
    %369 = memref.load %arg1[%c85] : memref<168xf32, #tpu.memory_space<smem>>
    %370 = vector.broadcast %369 : f32 to vector<2x20xf32>
    %371 = arith.mulf %370, %300 : vector<2x20xf32>
    %372 = arith.addf %368, %371 : vector<2x20xf32>
    %c86 = arith.constant 86 : index
    %373 = memref.load %arg1[%c86] : memref<168xf32, #tpu.memory_space<smem>>
    %374 = vector.broadcast %373 : f32 to vector<2x20xf32>
    %375 = arith.mulf %374, %301 : vector<2x20xf32>
    %376 = arith.addf %372, %375 : vector<2x20xf32>
    %c87 = arith.constant 87 : index
    %377 = memref.load %arg1[%c87] : memref<168xf32, #tpu.memory_space<smem>>
    %378 = vector.broadcast %377 : f32 to vector<2x20xf32>
    %379 = arith.mulf %378, %302 : vector<2x20xf32>
    %380 = arith.addf %376, %379 : vector<2x20xf32>
    %c88 = arith.constant 88 : index
    %381 = memref.load %arg1[%c88] : memref<168xf32, #tpu.memory_space<smem>>
    %382 = vector.broadcast %381 : f32 to vector<2x20xf32>
    %383 = arith.mulf %382, %303 : vector<2x20xf32>
    %384 = arith.addf %380, %383 : vector<2x20xf32>
    %c89 = arith.constant 89 : index
    %385 = memref.load %arg1[%c89] : memref<168xf32, #tpu.memory_space<smem>>
    %386 = vector.broadcast %385 : f32 to vector<2x20xf32>
    %387 = arith.mulf %386, %304 : vector<2x20xf32>
    %388 = arith.addf %384, %387 : vector<2x20xf32>
    %c90 = arith.constant 90 : index
    %389 = memref.load %arg1[%c90] : memref<168xf32, #tpu.memory_space<smem>>
    %390 = vector.broadcast %389 : f32 to vector<2x20xf32>
    %391 = arith.mulf %390, %305 : vector<2x20xf32>
    %392 = arith.addf %388, %391 : vector<2x20xf32>
    %c91 = arith.constant 91 : index
    %393 = memref.load %arg1[%c91] : memref<168xf32, #tpu.memory_space<smem>>
    %394 = vector.broadcast %393 : f32 to vector<2x20xf32>
    %395 = arith.mulf %394, %306 : vector<2x20xf32>
    %396 = arith.addf %392, %395 : vector<2x20xf32>
    %c92 = arith.constant 92 : index
    %397 = memref.load %arg1[%c92] : memref<168xf32, #tpu.memory_space<smem>>
    %398 = vector.broadcast %397 : f32 to vector<2x20xf32>
    %399 = arith.mulf %398, %307 : vector<2x20xf32>
    %400 = arith.addf %396, %399 : vector<2x20xf32>
    %c93 = arith.constant 93 : index
    %401 = memref.load %arg1[%c93] : memref<168xf32, #tpu.memory_space<smem>>
    %402 = vector.broadcast %401 : f32 to vector<2x20xf32>
    %403 = arith.mulf %402, %308 : vector<2x20xf32>
    %404 = arith.addf %400, %403 : vector<2x20xf32>
    %c94 = arith.constant 94 : index
    %405 = memref.load %arg1[%c94] : memref<168xf32, #tpu.memory_space<smem>>
    %406 = vector.broadcast %405 : f32 to vector<2x20xf32>
    %407 = arith.mulf %406, %309 : vector<2x20xf32>
    %408 = arith.addf %404, %407 : vector<2x20xf32>
    %c145 = arith.constant 145 : index
    %409 = memref.load %arg1[%c145] : memref<168xf32, #tpu.memory_space<smem>>
    %410 = vector.broadcast %409 : f32 to vector<2x20xf32>
    %411 = arith.mulf %410, %408 : vector<2x20xf32>
    %c148 = arith.constant 148 : index
    %412 = memref.load %arg1[%c148] : memref<168xf32, #tpu.memory_space<smem>>
    %413 = vector.broadcast %412 : f32 to vector<2x20xf32>
    %414 = arith.addf %411, %413 : vector<2x20xf32>
    %cst_9 = arith.constant 0.000000e+00 : f32
    %415 = vector.broadcast %cst_9 : f32 to vector<2x20xf32>
    %416 = arith.maximumf %414, %415 : vector<2x20xf32>
    %c95 = arith.constant 95 : index
    %417 = memref.load %arg1[%c95] : memref<168xf32, #tpu.memory_space<smem>>
    %418 = vector.broadcast %417 : f32 to vector<2x20xf32>
    %419 = arith.mulf %418, %285 : vector<2x20xf32>
    %c96 = arith.constant 96 : index
    %420 = memref.load %arg1[%c96] : memref<168xf32, #tpu.memory_space<smem>>
    %421 = vector.broadcast %420 : f32 to vector<2x20xf32>
    %422 = arith.mulf %421, %286 : vector<2x20xf32>
    %423 = arith.addf %419, %422 : vector<2x20xf32>
    %c97 = arith.constant 97 : index
    %424 = memref.load %arg1[%c97] : memref<168xf32, #tpu.memory_space<smem>>
    %425 = vector.broadcast %424 : f32 to vector<2x20xf32>
    %426 = arith.mulf %425, %287 : vector<2x20xf32>
    %427 = arith.addf %423, %426 : vector<2x20xf32>
    %c98 = arith.constant 98 : index
    %428 = memref.load %arg1[%c98] : memref<168xf32, #tpu.memory_space<smem>>
    %429 = vector.broadcast %428 : f32 to vector<2x20xf32>
    %430 = arith.mulf %429, %288 : vector<2x20xf32>
    %431 = arith.addf %427, %430 : vector<2x20xf32>
    %c99 = arith.constant 99 : index
    %432 = memref.load %arg1[%c99] : memref<168xf32, #tpu.memory_space<smem>>
    %433 = vector.broadcast %432 : f32 to vector<2x20xf32>
    %434 = arith.mulf %433, %289 : vector<2x20xf32>
    %435 = arith.addf %431, %434 : vector<2x20xf32>
    %c100 = arith.constant 100 : index
    %436 = memref.load %arg1[%c100] : memref<168xf32, #tpu.memory_space<smem>>
    %437 = vector.broadcast %436 : f32 to vector<2x20xf32>
    %438 = arith.mulf %437, %290 : vector<2x20xf32>
    %439 = arith.addf %435, %438 : vector<2x20xf32>
    %c101 = arith.constant 101 : index
    %440 = memref.load %arg1[%c101] : memref<168xf32, #tpu.memory_space<smem>>
    %441 = vector.broadcast %440 : f32 to vector<2x20xf32>
    %442 = arith.mulf %441, %291 : vector<2x20xf32>
    %443 = arith.addf %439, %442 : vector<2x20xf32>
    %c102 = arith.constant 102 : index
    %444 = memref.load %arg1[%c102] : memref<168xf32, #tpu.memory_space<smem>>
    %445 = vector.broadcast %444 : f32 to vector<2x20xf32>
    %446 = arith.mulf %445, %292 : vector<2x20xf32>
    %447 = arith.addf %443, %446 : vector<2x20xf32>
    %c103 = arith.constant 103 : index
    %448 = memref.load %arg1[%c103] : memref<168xf32, #tpu.memory_space<smem>>
    %449 = vector.broadcast %448 : f32 to vector<2x20xf32>
    %450 = arith.mulf %449, %293 : vector<2x20xf32>
    %451 = arith.addf %447, %450 : vector<2x20xf32>
    %c104 = arith.constant 104 : index
    %452 = memref.load %arg1[%c104] : memref<168xf32, #tpu.memory_space<smem>>
    %453 = vector.broadcast %452 : f32 to vector<2x20xf32>
    %454 = arith.mulf %453, %294 : vector<2x20xf32>
    %455 = arith.addf %451, %454 : vector<2x20xf32>
    %c105 = arith.constant 105 : index
    %456 = memref.load %arg1[%c105] : memref<168xf32, #tpu.memory_space<smem>>
    %457 = vector.broadcast %456 : f32 to vector<2x20xf32>
    %458 = arith.mulf %457, %295 : vector<2x20xf32>
    %459 = arith.addf %455, %458 : vector<2x20xf32>
    %c106 = arith.constant 106 : index
    %460 = memref.load %arg1[%c106] : memref<168xf32, #tpu.memory_space<smem>>
    %461 = vector.broadcast %460 : f32 to vector<2x20xf32>
    %462 = arith.mulf %461, %296 : vector<2x20xf32>
    %463 = arith.addf %459, %462 : vector<2x20xf32>
    %c107 = arith.constant 107 : index
    %464 = memref.load %arg1[%c107] : memref<168xf32, #tpu.memory_space<smem>>
    %465 = vector.broadcast %464 : f32 to vector<2x20xf32>
    %466 = arith.mulf %465, %297 : vector<2x20xf32>
    %467 = arith.addf %463, %466 : vector<2x20xf32>
    %c108 = arith.constant 108 : index
    %468 = memref.load %arg1[%c108] : memref<168xf32, #tpu.memory_space<smem>>
    %469 = vector.broadcast %468 : f32 to vector<2x20xf32>
    %470 = arith.mulf %469, %298 : vector<2x20xf32>
    %471 = arith.addf %467, %470 : vector<2x20xf32>
    %c109 = arith.constant 109 : index
    %472 = memref.load %arg1[%c109] : memref<168xf32, #tpu.memory_space<smem>>
    %473 = vector.broadcast %472 : f32 to vector<2x20xf32>
    %474 = arith.mulf %473, %299 : vector<2x20xf32>
    %475 = arith.addf %471, %474 : vector<2x20xf32>
    %c110 = arith.constant 110 : index
    %476 = memref.load %arg1[%c110] : memref<168xf32, #tpu.memory_space<smem>>
    %477 = vector.broadcast %476 : f32 to vector<2x20xf32>
    %478 = arith.mulf %477, %300 : vector<2x20xf32>
    %479 = arith.addf %475, %478 : vector<2x20xf32>
    %c111 = arith.constant 111 : index
    %480 = memref.load %arg1[%c111] : memref<168xf32, #tpu.memory_space<smem>>
    %481 = vector.broadcast %480 : f32 to vector<2x20xf32>
    %482 = arith.mulf %481, %301 : vector<2x20xf32>
    %483 = arith.addf %479, %482 : vector<2x20xf32>
    %c112 = arith.constant 112 : index
    %484 = memref.load %arg1[%c112] : memref<168xf32, #tpu.memory_space<smem>>
    %485 = vector.broadcast %484 : f32 to vector<2x20xf32>
    %486 = arith.mulf %485, %302 : vector<2x20xf32>
    %487 = arith.addf %483, %486 : vector<2x20xf32>
    %c113 = arith.constant 113 : index
    %488 = memref.load %arg1[%c113] : memref<168xf32, #tpu.memory_space<smem>>
    %489 = vector.broadcast %488 : f32 to vector<2x20xf32>
    %490 = arith.mulf %489, %303 : vector<2x20xf32>
    %491 = arith.addf %487, %490 : vector<2x20xf32>
    %c114 = arith.constant 114 : index
    %492 = memref.load %arg1[%c114] : memref<168xf32, #tpu.memory_space<smem>>
    %493 = vector.broadcast %492 : f32 to vector<2x20xf32>
    %494 = arith.mulf %493, %304 : vector<2x20xf32>
    %495 = arith.addf %491, %494 : vector<2x20xf32>
    %c115 = arith.constant 115 : index
    %496 = memref.load %arg1[%c115] : memref<168xf32, #tpu.memory_space<smem>>
    %497 = vector.broadcast %496 : f32 to vector<2x20xf32>
    %498 = arith.mulf %497, %305 : vector<2x20xf32>
    %499 = arith.addf %495, %498 : vector<2x20xf32>
    %c116 = arith.constant 116 : index
    %500 = memref.load %arg1[%c116] : memref<168xf32, #tpu.memory_space<smem>>
    %501 = vector.broadcast %500 : f32 to vector<2x20xf32>
    %502 = arith.mulf %501, %306 : vector<2x20xf32>
    %503 = arith.addf %499, %502 : vector<2x20xf32>
    %c117 = arith.constant 117 : index
    %504 = memref.load %arg1[%c117] : memref<168xf32, #tpu.memory_space<smem>>
    %505 = vector.broadcast %504 : f32 to vector<2x20xf32>
    %506 = arith.mulf %505, %307 : vector<2x20xf32>
    %507 = arith.addf %503, %506 : vector<2x20xf32>
    %c118 = arith.constant 118 : index
    %508 = memref.load %arg1[%c118] : memref<168xf32, #tpu.memory_space<smem>>
    %509 = vector.broadcast %508 : f32 to vector<2x20xf32>
    %510 = arith.mulf %509, %308 : vector<2x20xf32>
    %511 = arith.addf %507, %510 : vector<2x20xf32>
    %c119 = arith.constant 119 : index
    %512 = memref.load %arg1[%c119] : memref<168xf32, #tpu.memory_space<smem>>
    %513 = vector.broadcast %512 : f32 to vector<2x20xf32>
    %514 = arith.mulf %513, %309 : vector<2x20xf32>
    %515 = arith.addf %511, %514 : vector<2x20xf32>
    %c146 = arith.constant 146 : index
    %516 = memref.load %arg1[%c146] : memref<168xf32, #tpu.memory_space<smem>>
    %517 = vector.broadcast %516 : f32 to vector<2x20xf32>
    %518 = arith.mulf %517, %515 : vector<2x20xf32>
    %c149 = arith.constant 149 : index
    %519 = memref.load %arg1[%c149] : memref<168xf32, #tpu.memory_space<smem>>
    %520 = vector.broadcast %519 : f32 to vector<2x20xf32>
    %521 = arith.addf %518, %520 : vector<2x20xf32>
    %cst_10 = arith.constant 0.000000e+00 : f32
    %522 = vector.broadcast %cst_10 : f32 to vector<2x20xf32>
    %523 = arith.maximumf %521, %522 : vector<2x20xf32>
    %c120 = arith.constant 120 : index
    %524 = memref.load %arg1[%c120] : memref<168xf32, #tpu.memory_space<smem>>
    %525 = vector.broadcast %524 : f32 to vector<2x20xf32>
    %526 = arith.mulf %525, %285 : vector<2x20xf32>
    %c121 = arith.constant 121 : index
    %527 = memref.load %arg1[%c121] : memref<168xf32, #tpu.memory_space<smem>>
    %528 = vector.broadcast %527 : f32 to vector<2x20xf32>
    %529 = arith.mulf %528, %286 : vector<2x20xf32>
    %530 = arith.addf %526, %529 : vector<2x20xf32>
    %c122 = arith.constant 122 : index
    %531 = memref.load %arg1[%c122] : memref<168xf32, #tpu.memory_space<smem>>
    %532 = vector.broadcast %531 : f32 to vector<2x20xf32>
    %533 = arith.mulf %532, %287 : vector<2x20xf32>
    %534 = arith.addf %530, %533 : vector<2x20xf32>
    %c123 = arith.constant 123 : index
    %535 = memref.load %arg1[%c123] : memref<168xf32, #tpu.memory_space<smem>>
    %536 = vector.broadcast %535 : f32 to vector<2x20xf32>
    %537 = arith.mulf %536, %288 : vector<2x20xf32>
    %538 = arith.addf %534, %537 : vector<2x20xf32>
    %c124 = arith.constant 124 : index
    %539 = memref.load %arg1[%c124] : memref<168xf32, #tpu.memory_space<smem>>
    %540 = vector.broadcast %539 : f32 to vector<2x20xf32>
    %541 = arith.mulf %540, %289 : vector<2x20xf32>
    %542 = arith.addf %538, %541 : vector<2x20xf32>
    %c125 = arith.constant 125 : index
    %543 = memref.load %arg1[%c125] : memref<168xf32, #tpu.memory_space<smem>>
    %544 = vector.broadcast %543 : f32 to vector<2x20xf32>
    %545 = arith.mulf %544, %290 : vector<2x20xf32>
    %546 = arith.addf %542, %545 : vector<2x20xf32>
    %c126 = arith.constant 126 : index
    %547 = memref.load %arg1[%c126] : memref<168xf32, #tpu.memory_space<smem>>
    %548 = vector.broadcast %547 : f32 to vector<2x20xf32>
    %549 = arith.mulf %548, %291 : vector<2x20xf32>
    %550 = arith.addf %546, %549 : vector<2x20xf32>
    %c127 = arith.constant 127 : index
    %551 = memref.load %arg1[%c127] : memref<168xf32, #tpu.memory_space<smem>>
    %552 = vector.broadcast %551 : f32 to vector<2x20xf32>
    %553 = arith.mulf %552, %292 : vector<2x20xf32>
    %554 = arith.addf %550, %553 : vector<2x20xf32>
    %c128 = arith.constant 128 : index
    %555 = memref.load %arg1[%c128] : memref<168xf32, #tpu.memory_space<smem>>
    %556 = vector.broadcast %555 : f32 to vector<2x20xf32>
    %557 = arith.mulf %556, %293 : vector<2x20xf32>
    %558 = arith.addf %554, %557 : vector<2x20xf32>
    %c129 = arith.constant 129 : index
    %559 = memref.load %arg1[%c129] : memref<168xf32, #tpu.memory_space<smem>>
    %560 = vector.broadcast %559 : f32 to vector<2x20xf32>
    %561 = arith.mulf %560, %294 : vector<2x20xf32>
    %562 = arith.addf %558, %561 : vector<2x20xf32>
    %c130 = arith.constant 130 : index
    %563 = memref.load %arg1[%c130] : memref<168xf32, #tpu.memory_space<smem>>
    %564 = vector.broadcast %563 : f32 to vector<2x20xf32>
    %565 = arith.mulf %564, %295 : vector<2x20xf32>
    %566 = arith.addf %562, %565 : vector<2x20xf32>
    %c131 = arith.constant 131 : index
    %567 = memref.load %arg1[%c131] : memref<168xf32, #tpu.memory_space<smem>>
    %568 = vector.broadcast %567 : f32 to vector<2x20xf32>
    %569 = arith.mulf %568, %296 : vector<2x20xf32>
    %570 = arith.addf %566, %569 : vector<2x20xf32>
    %c132 = arith.constant 132 : index
    %571 = memref.load %arg1[%c132] : memref<168xf32, #tpu.memory_space<smem>>
    %572 = vector.broadcast %571 : f32 to vector<2x20xf32>
    %573 = arith.mulf %572, %297 : vector<2x20xf32>
    %574 = arith.addf %570, %573 : vector<2x20xf32>
    %c133 = arith.constant 133 : index
    %575 = memref.load %arg1[%c133] : memref<168xf32, #tpu.memory_space<smem>>
    %576 = vector.broadcast %575 : f32 to vector<2x20xf32>
    %577 = arith.mulf %576, %298 : vector<2x20xf32>
    %578 = arith.addf %574, %577 : vector<2x20xf32>
    %c134 = arith.constant 134 : index
    %579 = memref.load %arg1[%c134] : memref<168xf32, #tpu.memory_space<smem>>
    %580 = vector.broadcast %579 : f32 to vector<2x20xf32>
    %581 = arith.mulf %580, %299 : vector<2x20xf32>
    %582 = arith.addf %578, %581 : vector<2x20xf32>
    %c135 = arith.constant 135 : index
    %583 = memref.load %arg1[%c135] : memref<168xf32, #tpu.memory_space<smem>>
    %584 = vector.broadcast %583 : f32 to vector<2x20xf32>
    %585 = arith.mulf %584, %300 : vector<2x20xf32>
    %586 = arith.addf %582, %585 : vector<2x20xf32>
    %c136 = arith.constant 136 : index
    %587 = memref.load %arg1[%c136] : memref<168xf32, #tpu.memory_space<smem>>
    %588 = vector.broadcast %587 : f32 to vector<2x20xf32>
    %589 = arith.mulf %588, %301 : vector<2x20xf32>
    %590 = arith.addf %586, %589 : vector<2x20xf32>
    %c137 = arith.constant 137 : index
    %591 = memref.load %arg1[%c137] : memref<168xf32, #tpu.memory_space<smem>>
    %592 = vector.broadcast %591 : f32 to vector<2x20xf32>
    %593 = arith.mulf %592, %302 : vector<2x20xf32>
    %594 = arith.addf %590, %593 : vector<2x20xf32>
    %c138 = arith.constant 138 : index
    %595 = memref.load %arg1[%c138] : memref<168xf32, #tpu.memory_space<smem>>
    %596 = vector.broadcast %595 : f32 to vector<2x20xf32>
    %597 = arith.mulf %596, %303 : vector<2x20xf32>
    %598 = arith.addf %594, %597 : vector<2x20xf32>
    %c139 = arith.constant 139 : index
    %599 = memref.load %arg1[%c139] : memref<168xf32, #tpu.memory_space<smem>>
    %600 = vector.broadcast %599 : f32 to vector<2x20xf32>
    %601 = arith.mulf %600, %304 : vector<2x20xf32>
    %602 = arith.addf %598, %601 : vector<2x20xf32>
    %c140 = arith.constant 140 : index
    %603 = memref.load %arg1[%c140] : memref<168xf32, #tpu.memory_space<smem>>
    %604 = vector.broadcast %603 : f32 to vector<2x20xf32>
    %605 = arith.mulf %604, %305 : vector<2x20xf32>
    %606 = arith.addf %602, %605 : vector<2x20xf32>
    %c141 = arith.constant 141 : index
    %607 = memref.load %arg1[%c141] : memref<168xf32, #tpu.memory_space<smem>>
    %608 = vector.broadcast %607 : f32 to vector<2x20xf32>
    %609 = arith.mulf %608, %306 : vector<2x20xf32>
    %610 = arith.addf %606, %609 : vector<2x20xf32>
    %c142 = arith.constant 142 : index
    %611 = memref.load %arg1[%c142] : memref<168xf32, #tpu.memory_space<smem>>
    %612 = vector.broadcast %611 : f32 to vector<2x20xf32>
    %613 = arith.mulf %612, %307 : vector<2x20xf32>
    %614 = arith.addf %610, %613 : vector<2x20xf32>
    %c143 = arith.constant 143 : index
    %615 = memref.load %arg1[%c143] : memref<168xf32, #tpu.memory_space<smem>>
    %616 = vector.broadcast %615 : f32 to vector<2x20xf32>
    %617 = arith.mulf %616, %308 : vector<2x20xf32>
    %618 = arith.addf %614, %617 : vector<2x20xf32>
    %c144 = arith.constant 144 : index
    %619 = memref.load %arg1[%c144] : memref<168xf32, #tpu.memory_space<smem>>
    %620 = vector.broadcast %619 : f32 to vector<2x20xf32>
    %621 = arith.mulf %620, %309 : vector<2x20xf32>
    %622 = arith.addf %618, %621 : vector<2x20xf32>
    %c147 = arith.constant 147 : index
    %623 = memref.load %arg1[%c147] : memref<168xf32, #tpu.memory_space<smem>>
    %624 = vector.broadcast %623 : f32 to vector<2x20xf32>
    %625 = arith.mulf %624, %622 : vector<2x20xf32>
    %c150 = arith.constant 150 : index
    %626 = memref.load %arg1[%c150] : memref<168xf32, #tpu.memory_space<smem>>
    %627 = vector.broadcast %626 : f32 to vector<2x20xf32>
    %628 = arith.addf %625, %627 : vector<2x20xf32>
    %cst_11 = arith.constant 0.000000e+00 : f32
    %629 = vector.broadcast %cst_11 : f32 to vector<2x20xf32>
    %630 = arith.maximumf %628, %629 : vector<2x20xf32>
    %631 = vector.extract_strided_slice %416 {offsets = [0, 0], sizes = [2, 16], strides = [1, 1]} : vector<2x20xf32> to vector<2x16xf32>
    %632 = vector.extract_strided_slice %416 {offsets = [0, 1], sizes = [2, 16], strides = [1, 1]} : vector<2x20xf32> to vector<2x16xf32>
    %633 = vector.extract_strided_slice %416 {offsets = [0, 2], sizes = [2, 16], strides = [1, 1]} : vector<2x20xf32> to vector<2x16xf32>
    %634 = vector.extract_strided_slice %416 {offsets = [0, 3], sizes = [2, 16], strides = [1, 1]} : vector<2x20xf32> to vector<2x16xf32>
    %635 = vector.extract_strided_slice %416 {offsets = [0, 4], sizes = [2, 16], strides = [1, 1]} : vector<2x20xf32> to vector<2x16xf32>
    %636 = vector.extract_strided_slice %523 {offsets = [0, 0], sizes = [2, 16], strides = [1, 1]} : vector<2x20xf32> to vector<2x16xf32>
    %637 = vector.extract_strided_slice %523 {offsets = [0, 1], sizes = [2, 16], strides = [1, 1]} : vector<2x20xf32> to vector<2x16xf32>
    %638 = vector.extract_strided_slice %523 {offsets = [0, 2], sizes = [2, 16], strides = [1, 1]} : vector<2x20xf32> to vector<2x16xf32>
    %639 = vector.extract_strided_slice %523 {offsets = [0, 3], sizes = [2, 16], strides = [1, 1]} : vector<2x20xf32> to vector<2x16xf32>
    %640 = vector.extract_strided_slice %523 {offsets = [0, 4], sizes = [2, 16], strides = [1, 1]} : vector<2x20xf32> to vector<2x16xf32>
    %641 = vector.extract_strided_slice %630 {offsets = [0, 0], sizes = [2, 16], strides = [1, 1]} : vector<2x20xf32> to vector<2x16xf32>
    %642 = vector.extract_strided_slice %630 {offsets = [0, 1], sizes = [2, 16], strides = [1, 1]} : vector<2x20xf32> to vector<2x16xf32>
    %643 = vector.extract_strided_slice %630 {offsets = [0, 2], sizes = [2, 16], strides = [1, 1]} : vector<2x20xf32> to vector<2x16xf32>
    %644 = vector.extract_strided_slice %630 {offsets = [0, 3], sizes = [2, 16], strides = [1, 1]} : vector<2x20xf32> to vector<2x16xf32>
    %645 = vector.extract_strided_slice %630 {offsets = [0, 4], sizes = [2, 16], strides = [1, 1]} : vector<2x20xf32> to vector<2x16xf32>
    %c151 = arith.constant 151 : index
    %646 = memref.load %arg1[%c151] : memref<168xf32, #tpu.memory_space<smem>>
    %647 = vector.broadcast %646 : f32 to vector<2x16xf32>
    %648 = arith.mulf %647, %631 : vector<2x16xf32>
    %c152 = arith.constant 152 : index
    %649 = memref.load %arg1[%c152] : memref<168xf32, #tpu.memory_space<smem>>
    %650 = vector.broadcast %649 : f32 to vector<2x16xf32>
    %651 = arith.mulf %650, %632 : vector<2x16xf32>
    %652 = arith.addf %648, %651 : vector<2x16xf32>
    %c153 = arith.constant 153 : index
    %653 = memref.load %arg1[%c153] : memref<168xf32, #tpu.memory_space<smem>>
    %654 = vector.broadcast %653 : f32 to vector<2x16xf32>
    %655 = arith.mulf %654, %633 : vector<2x16xf32>
    %656 = arith.addf %652, %655 : vector<2x16xf32>
    %c154 = arith.constant 154 : index
    %657 = memref.load %arg1[%c154] : memref<168xf32, #tpu.memory_space<smem>>
    %658 = vector.broadcast %657 : f32 to vector<2x16xf32>
    %659 = arith.mulf %658, %634 : vector<2x16xf32>
    %660 = arith.addf %656, %659 : vector<2x16xf32>
    %c155 = arith.constant 155 : index
    %661 = memref.load %arg1[%c155] : memref<168xf32, #tpu.memory_space<smem>>
    %662 = vector.broadcast %661 : f32 to vector<2x16xf32>
    %663 = arith.mulf %662, %635 : vector<2x16xf32>
    %664 = arith.addf %660, %663 : vector<2x16xf32>
    %c156 = arith.constant 156 : index
    %665 = memref.load %arg1[%c156] : memref<168xf32, #tpu.memory_space<smem>>
    %666 = vector.broadcast %665 : f32 to vector<2x16xf32>
    %667 = arith.mulf %666, %636 : vector<2x16xf32>
    %668 = arith.addf %664, %667 : vector<2x16xf32>
    %c157 = arith.constant 157 : index
    %669 = memref.load %arg1[%c157] : memref<168xf32, #tpu.memory_space<smem>>
    %670 = vector.broadcast %669 : f32 to vector<2x16xf32>
    %671 = arith.mulf %670, %637 : vector<2x16xf32>
    %672 = arith.addf %668, %671 : vector<2x16xf32>
    %c158 = arith.constant 158 : index
    %673 = memref.load %arg1[%c158] : memref<168xf32, #tpu.memory_space<smem>>
    %674 = vector.broadcast %673 : f32 to vector<2x16xf32>
    %675 = arith.mulf %674, %638 : vector<2x16xf32>
    %676 = arith.addf %672, %675 : vector<2x16xf32>
    %c159 = arith.constant 159 : index
    %677 = memref.load %arg1[%c159] : memref<168xf32, #tpu.memory_space<smem>>
    %678 = vector.broadcast %677 : f32 to vector<2x16xf32>
    %679 = arith.mulf %678, %639 : vector<2x16xf32>
    %680 = arith.addf %676, %679 : vector<2x16xf32>
    %c160 = arith.constant 160 : index
    %681 = memref.load %arg1[%c160] : memref<168xf32, #tpu.memory_space<smem>>
    %682 = vector.broadcast %681 : f32 to vector<2x16xf32>
    %683 = arith.mulf %682, %640 : vector<2x16xf32>
    %684 = arith.addf %680, %683 : vector<2x16xf32>
    %c161 = arith.constant 161 : index
    %685 = memref.load %arg1[%c161] : memref<168xf32, #tpu.memory_space<smem>>
    %686 = vector.broadcast %685 : f32 to vector<2x16xf32>
    %687 = arith.mulf %686, %641 : vector<2x16xf32>
    %688 = arith.addf %684, %687 : vector<2x16xf32>
    %c162 = arith.constant 162 : index
    %689 = memref.load %arg1[%c162] : memref<168xf32, #tpu.memory_space<smem>>
    %690 = vector.broadcast %689 : f32 to vector<2x16xf32>
    %691 = arith.mulf %690, %642 : vector<2x16xf32>
    %692 = arith.addf %688, %691 : vector<2x16xf32>
    %c163 = arith.constant 163 : index
    %693 = memref.load %arg1[%c163] : memref<168xf32, #tpu.memory_space<smem>>
    %694 = vector.broadcast %693 : f32 to vector<2x16xf32>
    %695 = arith.mulf %694, %643 : vector<2x16xf32>
    %696 = arith.addf %692, %695 : vector<2x16xf32>
    %c164 = arith.constant 164 : index
    %697 = memref.load %arg1[%c164] : memref<168xf32, #tpu.memory_space<smem>>
    %698 = vector.broadcast %697 : f32 to vector<2x16xf32>
    %699 = arith.mulf %698, %644 : vector<2x16xf32>
    %700 = arith.addf %696, %699 : vector<2x16xf32>
    %c165 = arith.constant 165 : index
    %701 = memref.load %arg1[%c165] : memref<168xf32, #tpu.memory_space<smem>>
    %702 = vector.broadcast %701 : f32 to vector<2x16xf32>
    %703 = arith.mulf %702, %645 : vector<2x16xf32>
    %704 = arith.addf %700, %703 : vector<2x16xf32>
    %c166 = arith.constant 166 : index
    %705 = memref.load %arg1[%c166] : memref<168xf32, #tpu.memory_space<smem>>
    %706 = vector.broadcast %705 : f32 to vector<2x16xf32>
    %707 = arith.mulf %706, %704 : vector<2x16xf32>
    %c167 = arith.constant 167 : index
    %708 = memref.load %arg1[%c167] : memref<168xf32, #tpu.memory_space<smem>>
    %709 = vector.broadcast %708 : f32 to vector<2x16xf32>
    %710 = arith.addf %707, %709 : vector<2x16xf32>
    %cst_12 = arith.constant 0.000000e+00 : f32
    %711 = vector.broadcast %cst_12 : f32 to vector<2x16xf32>
    %712 = arith.maximumf %710, %711 : vector<2x16xf32>
    %c0_13 = arith.constant 0 : index
    %c0_14 = arith.constant 0 : index
    %713 = vector.load %arg2[%c0_13, %c0_14] : memref<16x1152xf32, #tpu.memory_space<vmem>>, vector<16x1152xf32>
    %cst_15 = arith.constant dense<0.000000e+00> : vector<2x1152xf32>
    %714 = tpu.matmul %712, %713, %cst_15 {dimension_numbers = #tpu.dot_dimension_numbers<[1], [0], [0], [1], [0, 0, 1, 1], [], []>} : vector<2x16xf32>, vector<16x1152xf32>, vector<2x1152xf32> -> vector<2x1152xf32>
    %c0_16 = arith.constant 0 : index
    %c0_17 = arith.constant 0 : index
    %715 = vector.load %arg3[%c0_16, %c0_17] : memref<1x1152xf32, #tpu.memory_space<vmem>>, vector<1x1152xf32>
    %716 = vector.broadcast %715 : vector<1x1152xf32> to vector<2x1152xf32>
    %717 = arith.addf %714, %716 : vector<2x1152xf32>
    %c0_18 = arith.constant 0 : index
    %c0_19 = arith.constant 0 : index
    %718 = vector.load %arg4[%c0_18, %c0_19] : memref<2x1152xf32, #tpu.memory_space<vmem>>, vector<2x1152xf32>
    tpu.vector_store %arg4[%c0_18, %c0_19], %717 {strides = array<i32>} : memref<2x1152xf32, #tpu.memory_space<vmem>>, vector<2x1152xf32>,
    return
  }
}

</mosaic_0001>

<llo_original>
// kernel: tpu_custom_call.1
$region0: #{tpu_custom_call.1}
  #allocation0 [shape = 'u32[]', space=smem, size = 0x4, offset = 0x4, fixed_abs, tag = 'smem constant byte address 0x4 - core index']
  #allocation1 [shape = 'u32[144,128]{1,0:T(1,128)}', space=vmem, size = 0x12000, scoped, tag = 'internal scratch']
  %s0 = inlined_call_operand.hbm [shape: f32[2,28], index: 0, kind: input, shape index: {}]
  %s1 = inlined_call_operand.hbm [shape: f32[168], index: 1, kind: input, shape index: {}]
  %s2 = inlined_call_operand.hbm [shape: f32[16,1152], index: 2, kind: input, shape index: {}]
  %s3 = inlined_call_operand.hbm [shape: f32[1,1152], index: 3, kind: input, shape index: {}]
  %s4 = inlined_call_operand.hbm [shape: f32[2,1152], index: 4, kind: output, shape index: {}]
  %s5 = sld [smem:[#allocation0]]
  $region42: #{tpu_custom_call.1} parent=0
    _
  %s7 = ssub.s32 1, %s5
  %s8 = scalar_select 0, %s7, %s5
  $region1: #{tpu_custom_call.1} parent=0
    #allocation2 [shape = 'u8[1024]{0}', space=vmem, size = 0x400, scoped, tag = 'input window, operand 0, single buffered']
    #allocation3 [shape = 's32[1]{0}', space=sflag, size = 0x4, scoped, tag = 'scoped memory for tpu_custom_call.1']
    #allocation4 [shape = 's32[1]{0}', space=sflag, size = 0x4, scoped, tag = 'scoped memory for tpu_custom_call.1']
    #allocation5 [shape = 's32[1]{0}', space=sflag, size = 0x4, scoped, tag = 'scoped memory for tpu_custom_call.1']
    #allocation6 [shape = 'u8[1024]{0}', space=smem, size = 0x400, scoped, tag = 'input window, operand 1, single buffered']
    #allocation7 [shape = 'u8[73728]{0}', space=vmem, size = 0x12000, scoped, tag = 'input window, operand 2, single buffered']
    #allocation8 [shape = 's32[1]{0}', space=sflag, size = 0x4, scoped, tag = 'scoped memory for tpu_custom_call.1']
    #allocation9 [shape = 'u8[4608]{0}', space=vmem, size = 0x1400, scoped, tag = 'input window, operand 3, single buffered']
    #allocation10 [shape = 'u8[9216]{0}', space=vmem, size = 0x2400, scoped, tag = 'output window, operand 0, single buffered']
    %9 = vsyncpa [#allocation3], 0
    %10 = vsyncpa [#allocation5], 0
    %11 = vsyncpa [#allocation8], 0
    %12 = vsyncpa [#allocation4], 0
    // Predicated region
    $region2: #{tpu_custom_call.1} parent=1 // pred_check
      _
    $region3: #{tpu_custom_call.1} parent=1 // pred_check_branch
      %14 = sbr.rel (0) target = $region5
    $region4: #{tpu_custom_call.1} parent=1 // pred_region
      %s16 = ssub.s32 32, 32
      %17 = vsyncadd [#allocation3], %s16
      %s19 = sshll.u32 [#allocation2], 4
      %s20 = int_to_ptr.vmem [resolvable:$true] %s19
      %22 = dma.hbm_to_vmem [thread:$0]  %s0, 32, %s20, [#allocation3]
    $region5: #{tpu_custom_call.1} parent=1 // pred_fallthru
      _
    // Predicated region
    $region6: #{tpu_custom_call.1} parent=1 // pred_check
      _
    $region7: #{tpu_custom_call.1} parent=1 // pred_check_branch
      %24 = sbr.rel (0) target = $region9
    $region8: #{tpu_custom_call.1} parent=1 // pred_region
      %s26 = ssub.s32 32, 32
      %27 = vsyncadd [#allocation5], %s26
      %30 = dma.hbm_to_smem %s1, 32, [#allocation6], [#allocation5]
    $region9: #{tpu_custom_call.1} parent=1 // pred_fallthru
      _
    // Predicated region
    $region10: #{tpu_custom_call.1} parent=1 // pred_check
      _
    $region11: #{tpu_custom_call.1} parent=1 // pred_check_branch
      %32 = sbr.rel (0) target = $region13
    $region12: #{tpu_custom_call.1} parent=1 // pred_region
      %s34 = ssub.s32 2304, 2304
      %35 = vsyncadd [#allocation8], %s34
      %s36 = sshll.u32 [#allocation7], 4
      %s37 = int_to_ptr.vmem [resolvable:$true] %s36
      %42 = dma.hbm_to_vmem [thread:$0]  %s2, 2304, %s37, [#allocation8], 1152, 1152, 72
    $region13: #{tpu_custom_call.1} parent=1 // pred_fallthru
      _
    // Predicated region
    $region14: #{tpu_custom_call.1} parent=1 // pred_check
      _
    $region15: #{tpu_custom_call.1} parent=1 // pred_check_branch
      %44 = sbr.rel (0) target = $region17
    $region16: #{tpu_custom_call.1} parent=1 // pred_region
      %s46 = ssub.s32 144, 144
      %47 = vsyncadd [#allocation8], %s46
      %s49 = sshll.u32 [#allocation9], 4
      %s50 = int_to_ptr.vmem [resolvable:$true] %s49
      %52 = dma.hbm_to_vmem [thread:$0]  %s3, 144, %s50, [#allocation8]
    $region17: #{tpu_custom_call.1} parent=1 // pred_fallthru
      _
    // Predicated region
    $region18: #{tpu_custom_call.1} parent=1 // pred_check
      _
    $region19: #{tpu_custom_call.1} parent=1 // pred_check_branch
      %54 = sbr.rel (0) target = $region21
    $region20: #{tpu_custom_call.1} parent=1 // pred_region
      %55 = dma.done [#allocation3], 32
    $region21: #{tpu_custom_call.1} parent=1 // pred_fallthru
      _
    // Predicated region
    $region22: #{tpu_custom_call.1} parent=1 // pred_check
      _
    $region23: #{tpu_custom_call.1} parent=1 // pred_check_branch
      %57 = sbr.rel (0) target = $region25
    $region24: #{tpu_custom_call.1} parent=1 // pred_region
      %58 = dma.done [#allocation5], 32
    $region25: #{tpu_custom_call.1} parent=1 // pred_fallthru
      _
    // Predicated region
    $region26: #{tpu_custom_call.1} parent=1 // pred_check
      _
    $region27: #{tpu_custom_call.1} parent=1 // pred_check_branch
      %60 = sbr.rel (0) target = $region29
    $region28: #{tpu_custom_call.1} parent=1 // pred_region
      %61 = dma.done [#allocation8], 2304
    $region29: #{tpu_custom_call.1} parent=1 // pred_fallthru
      _
    // Predicated region
    $region30: #{tpu_custom_call.1} parent=1 // pred_check
      _
    $region31: #{tpu_custom_call.1} parent=1 // pred_check_branch
      %63 = sbr.rel (0) target = $region33
    $region32: #{tpu_custom_call.1} parent=1 // pred_region
      %64 = dma.done [#allocation8], 144
    $region33: #{tpu_custom_call.1} parent=1 // pred_fallthru
      _
    %65 = sfence
    %v66 = vld [vmem:[#allocation2] sm:$0x3]
    %s67 = sld [smem:[#allocation6]]
    %v68 = vstv %s67
    %v69 = vmul.f32 %v68, %v66
    %s70 = sld [smem:[#allocation6 + $0x1]]
    %v71 = vstv %s70
    %v72 = vmul.f32 %v71, %v66
    %74 = vrot.lane.b32.xlu0 %v72, 127
    %v75 = vpop.permute.xlu0 %74
    %v77 = vadd.f32 %v69, %v75
    %s78 = sld [smem:[#allocation6 + $0x2]]
    %v79 = vstv %s78
    %v80 = vmul.f32 %v79, %v66
    %82 = vrot.lane.b32.xlu0 %v80, 126
    %v83 = vpop.permute.xlu0 %82
    %v85 = vadd.f32 %v77, %v83
    %s86 = sld [smem:[#allocation6 + $0x9]]
    %v87 = vstv %s86
    %v88 = vmul.f32 %v87, %v85
    %s89 = sld [smem:[#allocation6 + $0xc]]
    %v90 = vstv %s89
    %v91 = vadd.f32 %v88, %v90
    %v92 = vmax.f32 %v91, 0.0
    %s93 = sld [smem:[#allocation6 + $0x3]]
    %v94 = vstv %s93
    %v95 = vmul.f32 %v94, %v66
    %s96 = sld [smem:[#allocation6 + $0x4]]
    %v97 = vstv %s96
    %v98 = vmul.f32 %v97, %v66
    %100 = vrot.lane.b32.xlu0 %v98, 127
    %v101 = vpop.permute.xlu0 %100
    %v103 = vadd.f32 %v95, %v101
    %s104 = sld [smem:[#allocation6 + $0x5]]
    %v105 = vstv %s104
    %v106 = vmul.f32 %v105, %v66
    %108 = vrot.lane.b32.xlu0 %v106, 126
    %v109 = vpop.permute.xlu0 %108
    %v111 = vadd.f32 %v103, %v109
    %s112 = sld [smem:[#allocation6 + $0xa]]
    %v113 = vstv %s112
    %v114 = vmul.f32 %v113, %v111
    %s115 = sld [smem:[#allocation6 + $0xd]]
    %v116 = vstv %s115
    %v117 = vadd.f32 %v114, %v116
    %v118 = vmax.f32 %v117, 0.0
    %s119 = sld [smem:[#allocation6 + $0x6]]
    %v120 = vstv %s119
    %v121 = vmul.f32 %v120, %v66
    %s122 = sld [smem:[#allocation6 + $0x7]]
    %v123 = vstv %s122
    %v124 = vmul.f32 %v123, %v66
    %126 = vrot.lane.b32.xlu0 %v124, 127
    %v127 = vpop.permute.xlu0 %126
    %v129 = vadd.f32 %v121, %v127
    %s130 = sld [smem:[#allocation6 + $0x8]]
    %v131 = vstv %s130
    %v132 = vmul.f32 %v131, %v66
    %134 = vrot.lane.b32.xlu0 %v132, 126
    %v135 = vpop.permute.xlu0 %134
    %v137 = vadd.f32 %v129, %v135
    %s138 = sld [smem:[#allocation6 + $0xb]]
    %v139 = vstv %s138
    %v140 = vmul.f32 %v139, %v137
    %s141 = sld [smem:[#allocation6 + $0xe]]
    %v142 = vstv %s141
    %v143 = vadd.f32 %v140, %v142
    %v144 = vmax.f32 %v143, 0.0
    %s145 = sld [smem:[#allocation6 + $0xf]]
    %v146 = vstv %s145
    %v147 = vmul.f32 %v146, %v92
    %s148 = sld [smem:[#allocation6 + $0x10]]
    %v149 = vstv %s148
    %v150 = vmul.f32 %v149, %v92
    %152 = vrot.lane.b32.xlu0 %v150, 127
    %v153 = vpop.permute.xlu0 %152
    %v155 = vadd.f32 %v147, %v153
    %s156 = sld [smem:[#allocation6 + $0x11]]
    %v157 = vstv %s156
    %v158 = vmul.f32 %v157, %v92
    %160 = vrot.lane.b32.xlu0 %v158, 126
    %v161 = vpop.permute.xlu0 %160
    %v163 = vadd.f32 %v155, %v161
    %s164 = sld [smem:[#allocation6 + $0x12]]
    %v165 = vstv %s164
    %v166 = vmul.f32 %v165, %v118
    %v167 = vadd.f32 %v163, %v166
    %s168 = sld [smem:[#allocation6 + $0x13]]
    %v169 = vstv %s168
    %v170 = vmul.f32 %v169, %v118
    %172 = vrot.lane.b32.xlu0 %v170, 127
    %v173 = vpop.permute.xlu0 %172
    %v175 = vadd.f32 %v167, %v173
    %s176 = sld [smem:[#allocation6 + $0x14]]
    %v177 = vstv %s176
    %v178 = vmul.f32 %v177, %v118
    %180 = vrot.lane.b32.xlu0 %v178, 126
    %v181 = vpop.permute.xlu0 %180
    %v183 = vadd.f32 %v175, %v181
    %s184 = sld [smem:[#allocation6 + $0x15]]
    %v185 = vstv %s184
    %v186 = vmul.f32 %v185, %v144
    %v187 = vadd.f32 %v183, %v186
    %s188 = sld [smem:[#allocation6 + $0x16]]
    %v189 = vstv %s188
    %v190 = vmul.f32 %v189, %v144
    %192 = vrot.lane.b32.xlu0 %v190, 127
    %v193 = vpop.permute.xlu0 %192
    %v195 = vadd.f32 %v187, %v193
    %s196 = sld [smem:[#allocation6 + $0x17]]
    %v197 = vstv %s196
    %v198 = vmul.f32 %v197, %v144
    %200 = vrot.lane.b32.xlu0 %v198, 126
    %v201 = vpop.permute.xlu0 %200
    %v203 = vadd.f32 %v195, %v201
    %s204 = sld [smem:[#allocation6 + $0x3c]]
    %v205 = vstv %s204
    %v206 = vmul.f32 %v205, %v203
    %s207 = sld [smem:[#allocation6 + $0x41]]
    %v208 = vstv %s207
    %v209 = vadd.f32 %v206, %v208
    %v210 = vmax.f32 %v209, 0.0
    %s211 = sld [smem:[#allocation6 + $0x18]]
    %v212 = vstv %s211
    %v213 = vmul.f32 %v212, %v92
    %s214 = sld [smem:[#allocation6 + $0x19]]
    %v215 = vstv %s214
    %v216 = vmul.f32 %v215, %v92
    %218 = vrot.lane.b32.xlu0 %v216, 127
    %v219 = vpop.permute.xlu0 %218
    %v221 = vadd.f32 %v213, %v219
    %s222 = sld [smem:[#allocation6 + $0x1a]]
    %v223 = vstv %s222
    %v224 = vmul.f32 %v223, %v92
    %226 = vrot.lane.b32.xlu0 %v224, 126
    %v227 = vpop.permute.xlu0 %226
    %v229 = vadd.f32 %v221, %v227
    %s230 = sld [smem:[#allocation6 + $0x1b]]
    %v231 = vstv %s230
    %v232 = vmul.f32 %v231, %v118
    %v233 = vadd.f32 %v229, %v232
    %s234 = sld [smem:[#allocation6 + $0x1c]]
    %v235 = vstv %s234
    %v236 = vmul.f32 %v235, %v118
    %238 = vrot.lane.b32.xlu0 %v236, 127
    %v239 = vpop.permute.xlu0 %238
    %v241 = vadd.f32 %v233, %v239
    %s242 = sld [smem:[#allocation6 + $0x1d]]
    %v243 = vstv %s242
    %v244 = vmul.f32 %v243, %v118
    %246 = vrot.lane.b32.xlu0 %v244, 126
    %v247 = vpop.permute.xlu0 %246
    %v249 = vadd.f32 %v241, %v247
    %s250 = sld [smem:[#allocation6 + $0x1e]]
    %v251 = vstv %s250
    %v252 = vmul.f32 %v251, %v144
    %v253 = vadd.f32 %v249, %v252
    %s254 = sld [smem:[#allocation6 + $0x1f]]
    %v255 = vstv %s254
    %v256 = vmul.f32 %v255, %v144
    %258 = vrot.lane.b32.xlu0 %v256, 127
    %v259 = vpop.permute.xlu0 %258
    %v261 = vadd.f32 %v253, %v259
    %s262 = sld [smem:[#allocation6 + $0x20]]
    %v263 = vstv %s262
    %v264 = vmul.f32 %v263, %v144
    %266 = vrot.lane.b32.xlu0 %v264, 126
    %v267 = vpop.permute.xlu0 %266
    %v269 = vadd.f32 %v261, %v267
    %s270 = sld [smem:[#allocation6 + $0x3d]]
    %v271 = vstv %s270
    %v272 = vmul.f32 %v271, %v269
    %s273 = sld [smem:[#allocation6 + $0x42]]
    %v274 = vstv %s273
    %v275 = vadd.f32 %v272, %v274
    %v276 = vmax.f32 %v275, 0.0
    %s277 = sld [smem:[#allocation6 + $0x21]]
    %v278 = vstv %s277
    %v279 = vmul.f32 %v278, %v92
    %s280 = sld [smem:[#allocation6 + $0x22]]
    %v281 = vstv %s280
    %v282 = vmul.f32 %v281, %v92
    %284 = vrot.lane.b32.xlu0 %v282, 127
    %v285 = vpop.permute.xlu0 %284
    %v287 = vadd.f32 %v279, %v285
    %s288 = sld [smem:[#allocation6 + $0x23]]
    %v289 = vstv %s288
    %v290 = vmul.f32 %v289, %v92
    %292 = vrot.lane.b32.xlu0 %v290, 126
    %v293 = vpop.permute.xlu0 %292
    %v295 = vadd.f32 %v287, %v293
    %s296 = sld [smem:[#allocation6 + $0x24]]
    %v297 = vstv %s296
    %v298 = vmul.f32 %v297, %v118
    %v299 = vadd.f32 %v295, %v298
    %s300 = sld [smem:[#allocation6 + $0x25]]
    %v301 = vstv %s300
    %v302 = vmul.f32 %v301, %v118
    %304 = vrot.lane.b32.xlu0 %v302, 127
    %v305 = vpop.permute.xlu0 %304
    %v307 = vadd.f32 %v299, %v305
    %s308 = sld [smem:[#allocation6 + $0x26]]
    %v309 = vstv %s308
    %v310 = vmul.f32 %v309, %v118
    %312 = vrot.lane.b32.xlu0 %v310, 126
    %v313 = vpop.permute.xlu0 %312
    %v315 = vadd.f32 %v307, %v313
    %s316 = sld [smem:[#allocation6 + $0x27]]
    %v317 = vstv %s316
    %v318 = vmul.f32 %v317, %v144
    %v319 = vadd.f32 %v315, %v318
    %s320 = sld [smem:[#allocation6 + $0x28]]
    %v321 = vstv %s320
    %v322 = vmul.f32 %v321, %v144
    %324 = vrot.lane.b32.xlu0 %v322, 127
    %v325 = vpop.permute.xlu0 %324
    %v327 = vadd.f32 %v319, %v325
    %s328 = sld [smem:[#allocation6 + $0x29]]
    %v329 = vstv %s328
    %v330 = vmul.f32 %v329, %v144
    %332 = vrot.lane.b32.xlu0 %v330, 126
    %v333 = vpop.permute.xlu0 %332
    %v335 = vadd.f32 %v327, %v333
    %s336 = sld [smem:[#allocation6 + $0x3e]]
    %v337 = vstv %s336
    %v338 = vmul.f32 %v337, %v335
    %s339 = sld [smem:[#allocation6 + $0x43]]
    %v340 = vstv %s339
    %v341 = vadd.f32 %v338, %v340
    %v342 = vmax.f32 %v341, 0.0
    %s343 = sld [smem:[#allocation6 + $0x2a]]
    %v344 = vstv %s343
    %v345 = vmul.f32 %v344, %v92
    %s346 = sld [smem:[#allocation6 + $0x2b]]
    %v347 = vstv %s346
    %v348 = vmul.f32 %v347, %v92
    %350 = vrot.lane.b32.xlu0 %v348, 127
    %v351 = vpop.permute.xlu0 %350
    %v353 = vadd.f32 %v345, %v351
    %s354 = sld [smem:[#allocation6 + $0x2c]]
    %v355 = vstv %s354
    %v356 = vmul.f32 %v355, %v92
    %358 = vrot.lane.b32.xlu0 %v356, 126
    %v359 = vpop.permute.xlu0 %358
    %v361 = vadd.f32 %v353, %v359
    %s362 = sld [smem:[#allocation6 + $0x2d]]
    %v363 = vstv %s362
    %v364 = vmul.f32 %v363, %v118
    %v365 = vadd.f32 %v361, %v364
    %s366 = sld [smem:[#allocation6 + $0x2e]]
    %v367 = vstv %s366
    %v368 = vmul.f32 %v367, %v118
    %370 = vrot.lane.b32.xlu0 %v368, 127
    %v371 = vpop.permute.xlu0 %370
    %v373 = vadd.f32 %v365, %v371
    %s374 = sld [smem:[#allocation6 + $0x2f]]
    %v375 = vstv %s374
    %v376 = vmul.f32 %v375, %v118
    %378 = vrot.lane.b32.xlu0 %v376, 126
    %v379 = vpop.permute.xlu0 %378
    %v381 = vadd.f32 %v373, %v379
    %s382 = sld [smem:[#allocation6 + $0x30]]
    %v383 = vstv %s382
    %v384 = vmul.f32 %v383, %v144
    %v385 = vadd.f32 %v381, %v384
    %s386 = sld [smem:[#allocation6 + $0x31]]
    %v387 = vstv %s386
    %v388 = vmul.f32 %v387, %v144
    %390 = vrot.lane.b32.xlu0 %v388, 127
    %v391 = vpop.permute.xlu0 %390
    %v393 = vadd.f32 %v385, %v391
    %s394 = sld [smem:[#allocation6 + $0x32]]
    %v395 = vstv %s394
    %v396 = vmul.f32 %v395, %v144
    %398 = vrot.lane.b32.xlu0 %v396, 126
    %v399 = vpop.permute.xlu0 %398
    %v401 = vadd.f32 %v393, %v399
    %s402 = sld [smem:[#allocation6 + $0x3f]]
    %v403 = vstv %s402
    %v404 = vmul.f32 %v403, %v401
    %s405 = sld [smem:[#allocation6 + $0x44]]
    %v406 = vstv %s405
    %v407 = vadd.f32 %v404, %v406
    %v408 = vmax.f32 %v407, 0.0
    %s409 = sld [smem:[#allocation6 + $0x33]]
    %v410 = vstv %s409
    %v411 = vmul.f32 %v410, %v92
    %s412 = sld [smem:[#allocation6 + $0x34]]
    %v413 = vstv %s412
    %v414 = vmul.f32 %v413, %v92
    %416 = vrot.lane.b32.xlu0 %v414, 127
    %v417 = vpop.permute.xlu0 %416
    %v419 = vadd.f32 %v411, %v417
    %s420 = sld [smem:[#allocation6 + $0x35]]
    %v421 = vstv %s420
    %v422 = vmul.f32 %v421, %v92
    %424 = vrot.lane.b32.xlu0 %v422, 126
    %v425 = vpop.permute.xlu0 %424
    %v427 = vadd.f32 %v419, %v425
    %s428 = sld [smem:[#allocation6 + $0x36]]
    %v429 = vstv %s428
    %v430 = vmul.f32 %v429, %v118
    %v431 = vadd.f32 %v427, %v430
    %s432 = sld [smem:[#allocation6 + $0x37]]
    %v433 = vstv %s432
    %v434 = vmul.f32 %v433, %v118
    %436 = vrot.lane.b32.xlu0 %v434, 127
    %v437 = vpop.permute.xlu0 %436
    %v439 = vadd.f32 %v431, %v437
    %s440 = sld [smem:[#allocation6 + $0x38]]
    %v441 = vstv %s440
    %v442 = vmul.f32 %v441, %v118
    %444 = vrot.lane.b32.xlu0 %v442, 126
    %v445 = vpop.permute.xlu0 %444
    %v447 = vadd.f32 %v439, %v445
    %s448 = sld [smem:[#allocation6 + $0x39]]
    %v449 = vstv %s448
    %v450 = vmul.f32 %v449, %v144
    %v451 = vadd.f32 %v447, %v450
    %s452 = sld [smem:[#allocation6 + $0x3a]]
    %v453 = vstv %s452
    %v454 = vmul.f32 %v453, %v144
    %456 = vrot.lane.b32.xlu0 %v454, 127
    %v457 = vpop.permute.xlu0 %456
    %v459 = vadd.f32 %v451, %v457
    %s460 = sld [smem:[#allocation6 + $0x3b]]
    %v461 = vstv %s460
    %v462 = vmul.f32 %v461, %v144
    %464 = vrot.lane.b32.xlu0 %v462, 126
    %v465 = vpop.permute.xlu0 %464
    %v467 = vadd.f32 %v459, %v465
    %s468 = sld [smem:[#allocation6 + $0x40]]
    %v469 = vstv %s468
    %v470 = vmul.f32 %v469, %v467
    %s471 = sld [smem:[#allocation6 + $0x45]]
    %v472 = vstv %s471
    %v473 = vadd.f32 %v470, %v472
    %v474 = vmax.f32 %v473, 0.0
    %s475 = sld [smem:[#allocation6 + $0x46]]
    %v476 = vstv %s475
    %v477 = vmul.f32 %v476, %v210
    %s478 = sld [smem:[#allocation6 + $0x47]]
    %v479 = vstv %s478
    %v480 = vmul.f32 %v479, %v210
    %482 = vrot.lane.b32.xlu0 %v480, 127
    %v483 = vpop.permute.xlu0 %482
    %v485 = vadd.f32 %v477, %v483
    %s486 = sld [smem:[#allocation6 + $0x48]]
    %v487 = vstv %s486
    %v488 = vmul.f32 %v487, %v210
    %490 = vrot.lane.b32.xlu0 %v488, 126
    %v491 = vpop.permute.xlu0 %490
    %v493 = vadd.f32 %v485, %v491
    %s494 = sld [smem:[#allocation6 + $0x49]]
    %v495 = vstv %s494
    %v496 = vmul.f32 %v495, %v210
    %498 = vrot.lane.b32.xlu0 %v496, 125
    %v499 = vpop.permute.xlu0 %498
    %v501 = vadd.f32 %v493, %v499
    %s502 = sld [smem:[#allocation6 + $0x4a]]
    %v503 = vstv %s502
    %v504 = vmul.f32 %v503, %v210
    %506 = vrot.lane.b32.xlu0 %v504, 124
    %v507 = vpop.permute.xlu0 %506
    %v509 = vadd.f32 %v501, %v507
    %s510 = sld [smem:[#allocation6 + $0x4b]]
    %v511 = vstv %s510
    %v512 = vmul.f32 %v511, %v276
    %v513 = vadd.f32 %v509, %v512
    %s514 = sld [smem:[#allocation6 + $0x4c]]
    %v515 = vstv %s514
    %v516 = vmul.f32 %v515, %v276
    %518 = vrot.lane.b32.xlu0 %v516, 127
    %v519 = vpop.permute.xlu0 %518
    %v521 = vadd.f32 %v513, %v519
    %s522 = sld [smem:[#allocation6 + $0x4d]]
    %v523 = vstv %s522
    %v524 = vmul.f32 %v523, %v276
    %526 = vrot.lane.b32.xlu0 %v524, 126
    %v527 = vpop.permute.xlu0 %526
    %v529 = vadd.f32 %v521, %v527
    %s530 = sld [smem:[#allocation6 + $0x4e]]
    %v531 = vstv %s530
    %v532 = vmul.f32 %v531, %v276
    %534 = vrot.lane.b32.xlu0 %v532, 125
    %v535 = vpop.permute.xlu0 %534
    %v537 = vadd.f32 %v529, %v535
    %s538 = sld [smem:[#allocation6 + $0x4f]]
    %v539 = vstv %s538
    %v540 = vmul.f32 %v539, %v276
    %542 = vrot.lane.b32.xlu0 %v540, 124
    %v543 = vpop.permute.xlu0 %542
    %v545 = vadd.f32 %v537, %v543
    %s546 = sld [smem:[#allocation6 + $0x50]]
    %v547 = vstv %s546
    %v548 = vmul.f32 %v547, %v342
    %v549 = vadd.f32 %v545, %v548
    %s550 = sld [smem:[#allocation6 + $0x51]]
    %v551 = vstv %s550
    %v552 = vmul.f32 %v551, %v342
    %554 = vrot.lane.b32.xlu0 %v552, 127
    %v555 = vpop.permute.xlu0 %554
    %v557 = vadd.f32 %v549, %v555
    %s558 = sld [smem:[#allocation6 + $0x52]]
    %v559 = vstv %s558
    %v560 = vmul.f32 %v559, %v342
    %562 = vrot.lane.b32.xlu0 %v560, 126
    %v563 = vpop.permute.xlu0 %562
    %v565 = vadd.f32 %v557, %v563
    %s566 = sld [smem:[#allocation6 + $0x53]]
    %v567 = vstv %s566
    %v568 = vmul.f32 %v567, %v342
    %570 = vrot.lane.b32.xlu0 %v568, 125
    %v571 = vpop.permute.xlu0 %570
    %v573 = vadd.f32 %v565, %v571
    %s574 = sld [smem:[#allocation6 + $0x54]]
    %v575 = vstv %s574
    %v576 = vmul.f32 %v575, %v342
    %578 = vrot.lane.b32.xlu0 %v576, 124
    %v579 = vpop.permute.xlu0 %578
    %v581 = vadd.f32 %v573, %v579
    %s582 = sld [smem:[#allocation6 + $0x55]]
    %v583 = vstv %s582
    %v584 = vmul.f32 %v583, %v408
    %v585 = vadd.f32 %v581, %v584
    %s586 = sld [smem:[#allocation6 + $0x56]]
    %v587 = vstv %s586
    %v588 = vmul.f32 %v587, %v408
    %590 = vrot.lane.b32.xlu0 %v588, 127
    %v591 = vpop.permute.xlu0 %590
    %v593 = vadd.f32 %v585, %v591
    %s594 = sld [smem:[#allocation6 + $0x57]]
    %v595 = vstv %s594
    %v596 = vmul.f32 %v595, %v408
    %598 = vrot.lane.b32.xlu0 %v596, 126
    %v599 = vpop.permute.xlu0 %598
    %v601 = vadd.f32 %v593, %v599
    %s602 = sld [smem:[#allocation6 + $0x58]]
    %v603 = vstv %s602
    %v604 = vmul.f32 %v603, %v408
    %606 = vrot.lane.b32.xlu0 %v604, 125
    %v607 = vpop.permute.xlu0 %606
    %v609 = vadd.f32 %v601, %v607
    %s610 = sld [smem:[#allocation6 + $0x59]]
    %v611 = vstv %s610
    %v612 = vmul.f32 %v611, %v408
    %614 = vrot.lane.b32.xlu0 %v612, 124
    %v615 = vpop.permute.xlu0 %614
    %v617 = vadd.f32 %v609, %v615
    %s618 = sld [smem:[#allocation6 + $0x5a]]
    %v619 = vstv %s618
    %v620 = vmul.f32 %v619, %v474
    %v621 = vadd.f32 %v617, %v620
    %s622 = sld [smem:[#allocation6 + $0x5b]]
    %v623 = vstv %s622
    %v624 = vmul.f32 %v623, %v474
    %626 = vrot.lane.b32.xlu0 %v624, 127
    %v627 = vpop.permute.xlu0 %626
    %v629 = vadd.f32 %v621, %v627
    %s630 = sld [smem:[#allocation6 + $0x5c]]
    %v631 = vstv %s630
    %v632 = vmul.f32 %v631, %v474
    %634 = vrot.lane.b32.xlu0 %v632, 126
    %v635 = vpop.permute.xlu0 %634
    %v637 = vadd.f32 %v629, %v635
    %s638 = sld [smem:[#allocation6 + $0x5d]]
    %v639 = vstv %s638
    %v640 = vmul.f32 %v639, %v474
    %642 = vrot.lane.b32.xlu0 %v640, 125
    %v643 = vpop.permute.xlu0 %642
    %v645 = vadd.f32 %v637, %v643
    %s646 = sld [smem:[#allocation6 + $0x5e]]
    %v647 = vstv %s646
    %v648 = vmul.f32 %v647, %v474
    %650 = vrot.lane.b32.xlu0 %v648, 124
    %v651 = vpop.permute.xlu0 %650
    %v653 = vadd.f32 %v645, %v651
    %s654 = sld [smem:[#allocation6 + $0x91]]
    %v655 = vstv %s654
    %v656 = vmul.f32 %v655, %v653
    %s657 = sld [smem:[#allocation6 + $0x94]]
    %v658 = vstv %s657
    %v659 = vadd.f32 %v656, %v658
    %v660 = vmax.f32 %v659, 0.0
    %s661 = sld [smem:[#allocation6 + $0x5f]]
    %v662 = vstv %s661
    %v663 = vmul.f32 %v662, %v210
    %s664 = sld [smem:[#allocation6 + $0x60]]
    %v665 = vstv %s664
    %v666 = vmul.f32 %v665, %v210
    %668 = vrot.lane.b32.xlu0 %v666, 127
    %v669 = vpop.permute.xlu0 %668
    %v671 = vadd.f32 %v663, %v669
    %s672 = sld [smem:[#allocation6 + $0x61]]
    %v673 = vstv %s672
    %v674 = vmul.f32 %v673, %v210
    %676 = vrot.lane.b32.xlu0 %v674, 126
    %v677 = vpop.permute.xlu0 %676
    %v679 = vadd.f32 %v671, %v677
    %s680 = sld [smem:[#allocation6 + $0x62]]
    %v681 = vstv %s680
    %v682 = vmul.f32 %v681, %v210
    %684 = vrot.lane.b32.xlu0 %v682, 125
    %v685 = vpop.permute.xlu0 %684
    %v687 = vadd.f32 %v679, %v685
    %s688 = sld [smem:[#allocation6 + $0x63]]
    %v689 = vstv %s688
    %v690 = vmul.f32 %v689, %v210
    %692 = vrot.lane.b32.xlu0 %v690, 124
    %v693 = vpop.permute.xlu0 %692
    %v695 = vadd.f32 %v687, %v693
    %s696 = sld [smem:[#allocation6 + $0x64]]
    %v697 = vstv %s696
    %v698 = vmul.f32 %v697, %v276
    %v699 = vadd.f32 %v695, %v698
    %s700 = sld [smem:[#allocation6 + $0x65]]
    %v701 = vstv %s700
    %v702 = vmul.f32 %v701, %v276
    %704 = vrot.lane.b32.xlu0 %v702, 127
    %v705 = vpop.permute.xlu0 %704
    %v707 = vadd.f32 %v699, %v705
    %s708 = sld [smem:[#allocation6 + $0x66]]
    %v709 = vstv %s708
    %v710 = vmul.f32 %v709, %v276
    %712 = vrot.lane.b32.xlu0 %v710, 126
    %v713 = vpop.permute.xlu0 %712
    %v715 = vadd.f32 %v707, %v713
    %s716 = sld [smem:[#allocation6 + $0x67]]
    %v717 = vstv %s716
    %v718 = vmul.f32 %v717, %v276
    %720 = vrot.lane.b32.xlu0 %v718, 125
    %v721 = vpop.permute.xlu0 %720
    %v723 = vadd.f32 %v715, %v721
    %s724 = sld [smem:[#allocation6 + $0x68]]
    %v725 = vstv %s724
    %v726 = vmul.f32 %v725, %v276
    %728 = vrot.lane.b32.xlu0 %v726, 124
    %v729 = vpop.permute.xlu0 %728
    %v731 = vadd.f32 %v723, %v729
    %s732 = sld [smem:[#allocation6 + $0x69]]
    %v733 = vstv %s732
    %v734 = vmul.f32 %v733, %v342
    %v735 = vadd.f32 %v731, %v734
    %s736 = sld [smem:[#allocation6 + $0x6a]]
    %v737 = vstv %s736
    %v738 = vmul.f32 %v737, %v342
    %740 = vrot.lane.b32.xlu0 %v738, 127
    %v741 = vpop.permute.xlu0 %740
    %v743 = vadd.f32 %v735, %v741
    %s744 = sld [smem:[#allocation6 + $0x6b]]
    %v745 = vstv %s744
    %v746 = vmul.f32 %v745, %v342
    %748 = vrot.lane.b32.xlu0 %v746, 126
    %v749 = vpop.permute.xlu0 %748
    %v751 = vadd.f32 %v743, %v749
    %s752 = sld [smem:[#allocation6 + $0x6c]]
    %v753 = vstv %s752
    %v754 = vmul.f32 %v753, %v342
    %756 = vrot.lane.b32.xlu0 %v754, 125
    %v757 = vpop.permute.xlu0 %756
    %v759 = vadd.f32 %v751, %v757
    %s760 = sld [smem:[#allocation6 + $0x6d]]
    %v761 = vstv %s760
    %v762 = vmul.f32 %v761, %v342
    %764 = vrot.lane.b32.xlu0 %v762, 124
    %v765 = vpop.permute.xlu0 %764
    %v767 = vadd.f32 %v759, %v765
    %s768 = sld [smem:[#allocation6 + $0x6e]]
    %v769 = vstv %s768
    %v770 = vmul.f32 %v769, %v408
    %v771 = vadd.f32 %v767, %v770
    %s772 = sld [smem:[#allocation6 + $0x6f]]
    %v773 = vstv %s772
    %v774 = vmul.f32 %v773, %v408
    %776 = vrot.lane.b32.xlu0 %v774, 127
    %v777 = vpop.permute.xlu0 %776
    %v779 = vadd.f32 %v771, %v777
    %s780 = sld [smem:[#allocation6 + $0x70]]
    %v781 = vstv %s780
    %v782 = vmul.f32 %v781, %v408
    %784 = vrot.lane.b32.xlu0 %v782, 126
    %v785 = vpop.permute.xlu0 %784
    %v787 = vadd.f32 %v779, %v785
    %s788 = sld [smem:[#allocation6 + $0x71]]
    %v789 = vstv %s788
    %v790 = vmul.f32 %v789, %v408
    %792 = vrot.lane.b32.xlu0 %v790, 125
    %v793 = vpop.permute.xlu0 %792
    %v795 = vadd.f32 %v787, %v793
    %s796 = sld [smem:[#allocation6 + $0x72]]
    %v797 = vstv %s796
    %v798 = vmul.f32 %v797, %v408
    %800 = vrot.lane.b32.xlu0 %v798, 124
    %v801 = vpop.permute.xlu0 %800
    %v803 = vadd.f32 %v795, %v801
    %s804 = sld [smem:[#allocation6 + $0x73]]
    %v805 = vstv %s804
    %v806 = vmul.f32 %v805, %v474
    %v807 = vadd.f32 %v803, %v806
    %s808 = sld [smem:[#allocation6 + $0x74]]
    %v809 = vstv %s808
    %v810 = vmul.f32 %v809, %v474
    %812 = vrot.lane.b32.xlu0 %v810, 127
    %v813 = vpop.permute.xlu0 %812
    %v815 = vadd.f32 %v807, %v813
    %s816 = sld [smem:[#allocation6 + $0x75]]
    %v817 = vstv %s816
    %v818 = vmul.f32 %v817, %v474
    %820 = vrot.lane.b32.xlu0 %v818, 126
    %v821 = vpop.permute.xlu0 %820
    %v823 = vadd.f32 %v815, %v821
    %s824 = sld [smem:[#allocation6 + $0x76]]
    %v825 = vstv %s824
    %v826 = vmul.f32 %v825, %v474
    %828 = vrot.lane.b32.xlu0 %v826, 125
    %v829 = vpop.permute.xlu0 %828
    %v831 = vadd.f32 %v823, %v829
    %s832 = sld [smem:[#allocation6 + $0x77]]
    %v833 = vstv %s832
    %v834 = vmul.f32 %v833, %v474
    %836 = vrot.lane.b32.xlu0 %v834, 124
    %v837 = vpop.permute.xlu0 %836
    %v839 = vadd.f32 %v831, %v837
    %s840 = sld [smem:[#allocation6 + $0x92]]
    %v841 = vstv %s840
    %v842 = vmul.f32 %v841, %v839
    %s843 = sld [smem:[#allocation6 + $0x95]]
    %v844 = vstv %s843
    %v845 = vadd.f32 %v842, %v844
    %v846 = vmax.f32 %v845, 0.0
    %s847 = sld [smem:[#allocation6 + $0x78]]
    %v848 = vstv %s847
    %v849 = vmul.f32 %v848, %v210
    %s850 = sld [smem:[#allocation6 + $0x79]]
    %v851 = vstv %s850
    %v852 = vmul.f32 %v851, %v210
    %854 = vrot.lane.b32.xlu0 %v852, 127
    %v855 = vpop.permute.xlu0 %854
    %v857 = vadd.f32 %v849, %v855
    %s858 = sld [smem:[#allocation6 + $0x7a]]
    %v859 = vstv %s858
    %v860 = vmul.f32 %v859, %v210
    %862 = vrot.lane.b32.xlu0 %v860, 126
    %v863 = vpop.permute.xlu0 %862
    %v865 = vadd.f32 %v857, %v863
    %s866 = sld [smem:[#allocation6 + $0x7b]]
    %v867 = vstv %s866
    %v868 = vmul.f32 %v867, %v210
    %870 = vrot.lane.b32.xlu0 %v868, 125
    %v871 = vpop.permute.xlu0 %870
    %v873 = vadd.f32 %v865, %v871
    %s874 = sld [smem:[#allocation6 + $0x7c]]
    %v875 = vstv %s874
    %v876 = vmul.f32 %v875, %v210
    %878 = vrot.lane.b32.xlu0 %v876, 124
    %v879 = vpop.permute.xlu0 %878
    %v881 = vadd.f32 %v873, %v879
    %s882 = sld [smem:[#allocation6 + $0x7d]]
    %v883 = vstv %s882
    %v884 = vmul.f32 %v883, %v276
    %v885 = vadd.f32 %v881, %v884
    %s886 = sld [smem:[#allocation6 + $0x7e]]
    %v887 = vstv %s886
    %v888 = vmul.f32 %v887, %v276
    %890 = vrot.lane.b32.xlu0 %v888, 127
    %v891 = vpop.permute.xlu0 %890
    %v893 = vadd.f32 %v885, %v891
    %s894 = sld [smem:[#allocation6 + $0x7f]]
    %v895 = vstv %s894
    %v896 = vmul.f32 %v895, %v276
    %898 = vrot.lane.b32.xlu0 %v896, 126
    %v899 = vpop.permute.xlu0 %898
    %v901 = vadd.f32 %v893, %v899
    %s902 = sld [smem:[#allocation6 + $0x80]]
    %v903 = vstv %s902
    %v904 = vmul.f32 %v903, %v276
    %906 = vrot.lane.b32.xlu0 %v904, 125
    %v907 = vpop.permute.xlu0 %906
    %v909 = vadd.f32 %v901, %v907
    %s910 = sld [smem:[#allocation6 + $0x81]]
    %v911 = vstv %s910
    %v912 = vmul.f32 %v911, %v276
    %914 = vrot.lane.b32.xlu0 %v912, 124
    %v915 = vpop.permute.xlu0 %914
    %v917 = vadd.f32 %v909, %v915
    %s918 = sld [smem:[#allocation6 + $0x82]]
    %v919 = vstv %s918
    %v920 = vmul.f32 %v919, %v342
    %v921 = vadd.f32 %v917, %v920
    %s922 = sld [smem:[#allocation6 + $0x83]]
    %v923 = vstv %s922
    %v924 = vmul.f32 %v923, %v342
    %926 = vrot.lane.b32.xlu0 %v924, 127
    %v927 = vpop.permute.xlu0 %926
    %v929 = vadd.f32 %v921, %v927
    %s930 = sld [smem:[#allocation6 + $0x84]]
    %v931 = vstv %s930
    %v932 = vmul.f32 %v931, %v342
    %934 = vrot.lane.b32.xlu0 %v932, 126
    %v935 = vpop.permute.xlu0 %934
    %v937 = vadd.f32 %v929, %v935
    %s938 = sld [smem:[#allocation6 + $0x85]]
    %v939 = vstv %s938
    %v940 = vmul.f32 %v939, %v342
    %942 = vrot.lane.b32.xlu0 %v940, 125
    %v943 = vpop.permute.xlu0 %942
    %v945 = vadd.f32 %v937, %v943
    %s946 = sld [smem:[#allocation6 + $0x86]]
    %v947 = vstv %s946
    %v948 = vmul.f32 %v947, %v342
    %950 = vrot.lane.b32.xlu0 %v948, 124
    %v951 = vpop.permute.xlu0 %950
    %v953 = vadd.f32 %v945, %v951
    %s954 = sld [smem:[#allocation6 + $0x87]]
    %v955 = vstv %s954
    %v956 = vmul.f32 %v955, %v408
    %v957 = vadd.f32 %v953, %v956
    %s958 = sld [smem:[#allocation6 + $0x88]]
    %v959 = vstv %s958
    %v960 = vmul.f32 %v959, %v408
    %962 = vrot.lane.b32.xlu0 %v960, 127
    %v963 = vpop.permute.xlu0 %962
    %v965 = vadd.f32 %v957, %v963
    %s966 = sld [smem:[#allocation6 + $0x89]]
    %v967 = vstv %s966
    %v968 = vmul.f32 %v967, %v408
    %970 = vrot.lane.b32.xlu0 %v968, 126
    %v971 = vpop.permute.xlu0 %970
    %v973 = vadd.f32 %v965, %v971
    %s974 = sld [smem:[#allocation6 + $0x8a]]
    %v975 = vstv %s974
    %v976 = vmul.f32 %v975, %v408
    %978 = vrot.lane.b32.xlu0 %v976, 125
    %v979 = vpop.permute.xlu0 %978
    %v981 = vadd.f32 %v973, %v979
    %s982 = sld [smem:[#allocation6 + $0x8b]]
    %v983 = vstv %s982
    %v984 = vmul.f32 %v983, %v408
    %986 = vrot.lane.b32.xlu0 %v984, 124
    %v987 = vpop.permute.xlu0 %986
    %v989 = vadd.f32 %v981, %v987
    %s990 = sld [smem:[#allocation6 + $0x8c]]
    %v991 = vstv %s990
    %v992 = vmul.f32 %v991, %v474
    %v993 = vadd.f32 %v989, %v992
    %s994 = sld [smem:[#allocation6 + $0x8d]]
    %v995 = vstv %s994
    %v996 = vmul.f32 %v995, %v474
    %998 = vrot.lane.b32.xlu0 %v996, 127
    %v999 = vpop.permute.xlu0 %998
    %v1001 = vadd.f32 %v993, %v999
    %s1002 = sld [smem:[#allocation6 + $0x8e]]
    %v1003 = vstv %s1002
    %v1004 = vmul.f32 %v1003, %v474
    %1006 = vrot.lane.b32.xlu0 %v1004, 126
    %v1007 = vpop.permute.xlu0 %1006
    %v1009 = vadd.f32 %v1001, %v1007
    %s1010 = sld [smem:[#allocation6 + $0x8f]]
    %v1011 = vstv %s1010
    %v1012 = vmul.f32 %v1011, %v474
    %1014 = vrot.lane.b32.xlu0 %v1012, 125
    %v1015 = vpop.permute.xlu0 %1014
    %v1017 = vadd.f32 %v1009, %v1015
    %s1018 = sld [smem:[#allocation6 + $0x90]]
    %v1019 = vstv %s1018
    %v1020 = vmul.f32 %v1019, %v474
    %1022 = vrot.lane.b32.xlu0 %v1020, 124
    %v1023 = vpop.permute.xlu0 %1022
    %v1025 = vadd.f32 %v1017, %v1023
    %s1026 = sld [smem:[#allocation6 + $0x93]]
    %v1027 = vstv %s1026
    %v1028 = vmul.f32 %v1027, %v1025
    %s1029 = sld [smem:[#allocation6 + $0x96]]
    %v1030 = vstv %s1029
    %v1031 = vadd.f32 %v1028, %v1030
    %v1032 = vmax.f32 %v1031, 0.0
    %s1033 = sld [smem:[#allocation6 + $0x97]]
    %v1034 = vstv %s1033
    %v1035 = vmul.f32 %v1034, %v660
    %s1036 = sld [smem:[#allocation6 + $0x98]]
    %v1037 = vstv %s1036
    %v1038 = vmul.f32 %v1037, %v660
    %1040 = vrot.lane.b32.xlu0 %v1038, 127
    %v1041 = vpop.permute.xlu0 %1040
    %v1043 = vadd.f32 %v1035, %v1041
    %s1044 = sld [smem:[#allocation6 + $0x99]]
    %v1045 = vstv %s1044
    %v1046 = vmul.f32 %v1045, %v660
    %1048 = vrot.lane.b32.xlu0 %v1046, 126
    %v1049 = vpop.permute.xlu0 %1048
    %v1051 = vadd.f32 %v1043, %v1049
    %s1052 = sld [smem:[#allocation6 + $0x9a]]
    %v1053 = vstv %s1052
    %v1054 = vmul.f32 %v1053, %v660
    %1056 = vrot.lane.b32.xlu0 %v1054, 125
    %v1057 = vpop.permute.xlu0 %1056
    %v1059 = vadd.f32 %v1051, %v1057
    %s1060 = sld [smem:[#allocation6 + $0x9b]]
    %v1061 = vstv %s1060
    %v1062 = vmul.f32 %v1061, %v660
    %1064 = vrot.lane.b32.xlu0 %v1062, 124
    %v1065 = vpop.permute.xlu0 %1064
    %v1067 = vadd.f32 %v1059, %v1065
    %s1068 = sld [smem:[#allocation6 + $0x9c]]
    %v1069 = vstv %s1068
    %v1070 = vmul.f32 %v1069, %v846
    %v1071 = vadd.f32 %v1067, %v1070
    %s1072 = sld [smem:[#allocation6 + $0x9d]]
    %v1073 = vstv %s1072
    %v1074 = vmul.f32 %v1073, %v846
    %1076 = vrot.lane.b32.xlu0 %v1074, 127
    %v1077 = vpop.permute.xlu0 %1076
    %v1079 = vadd.f32 %v1071, %v1077
    %s1080 = sld [smem:[#allocation6 + $0x9e]]
    %v1081 = vstv %s1080
    %v1082 = vmul.f32 %v1081, %v846
    %1084 = vrot.lane.b32.xlu0 %v1082, 126
    %v1085 = vpop.permute.xlu0 %1084
    %v1087 = vadd.f32 %v1079, %v1085
    %s1088 = sld [smem:[#allocation6 + $0x9f]]
    %v1089 = vstv %s1088
    %v1090 = vmul.f32 %v1089, %v846
    %1092 = vrot.lane.b32.xlu0 %v1090, 125
    %v1093 = vpop.permute.xlu0 %1092
    %v1095 = vadd.f32 %v1087, %v1093
    %s1096 = sld [smem:[#allocation6 + $0xa0]]
    %v1097 = vstv %s1096
    %v1098 = vmul.f32 %v1097, %v846
    %1100 = vrot.lane.b32.xlu0 %v1098, 124
    %v1101 = vpop.permute.xlu0 %1100
    %v1103 = vadd.f32 %v1095, %v1101
    %s1104 = sld [smem:[#allocation6 + $0xa1]]
    %v1105 = vstv %s1104
    %v1106 = vmul.f32 %v1105, %v1032
    %v1107 = vadd.f32 %v1103, %v1106
    %s1108 = sld [smem:[#allocation6 + $0xa2]]
    %v1109 = vstv %s1108
    %v1110 = vmul.f32 %v1109, %v1032
    %1112 = vrot.lane.b32.xlu0 %v1110, 127
    %v1113 = vpop.permute.xlu0 %1112
    %v1115 = vadd.f32 %v1107, %v1113
    %s1116 = sld [smem:[#allocation6 + $0xa3]]
    %v1117 = vstv %s1116
    %v1118 = vmul.f32 %v1117, %v1032
    %1120 = vrot.lane.b32.xlu0 %v1118, 126
    %v1121 = vpop.permute.xlu0 %1120
    %v1123 = vadd.f32 %v1115, %v1121
    %s1124 = sld [smem:[#allocation6 + $0xa4]]
    %v1125 = vstv %s1124
    %v1126 = vmul.f32 %v1125, %v1032
    %1128 = vrot.lane.b32.xlu0 %v1126, 125
    %v1129 = vpop.permute.xlu0 %1128
    %v1131 = vadd.f32 %v1123, %v1129
    %s1132 = sld [smem:[#allocation6 + $0xa5]]
    %v1133 = vstv %s1132
    %v1134 = vmul.f32 %v1133, %v1032
    %1136 = vrot.lane.b32.xlu0 %v1134, 124
    %v1137 = vpop.permute.xlu0 %1136
    %v1139 = vadd.f32 %v1131, %v1137
    %s1140 = sld [smem:[#allocation6 + $0xa6]]
    %v1141 = vstv %s1140
    %v1142 = vmul.f32 %v1141, %v1139
    %s1143 = sld [smem:[#allocation6 + $0xa7]]
    %v1144 = vstv %s1143
    %v1145 = vadd.f32 %v1142, %v1144
    %v1146 = vmax.f32 %v1145, 0.0
    %v1147 = vld [vmem:[#allocation7] sm:$0xff]
    %v1148 = vld [vmem:[#allocation7 + $0x8] sm:$0xff]
    %v1149 = vld [vmem:[#allocation7 + $0x10] sm:$0xff]
    %v1150 = vld [vmem:[#allocation7 + $0x18] sm:$0xff]
    %v1151 = vld [vmem:[#allocation7 + $0x20] sm:$0xff]
    %v1152 = vld [vmem:[#allocation7 + $0x28] sm:$0xff]
    %v1153 = vld [vmem:[#allocation7 + $0x30] sm:$0xff]
    %v1154 = vld [vmem:[#allocation7 + $0x38] sm:$0xff]
    %v1155 = vld [vmem:[#allocation7 + $0x40] sm:$0xff]
    %v1156 = vld [vmem:[#allocation7 + $0x48] sm:$0xff]
    %v1157 = vld [vmem:[#allocation7 + $0x50] sm:$0xff]
    %v1158 = vld [vmem:[#allocation7 + $0x58] sm:$0xff]
    %v1159 = vld [vmem:[#allocation7 + $0x60] sm:$0xff]
    %v1160 = vld [vmem:[#allocation7 + $0x68] sm:$0xff]
    %v1161 = vld [vmem:[#allocation7 + $0x70] sm:$0xff]
    %v1162 = vld [vmem:[#allocation7 + $0x78] sm:$0xff]
    %v1163 = vld [vmem:[#allocation7 + $0x80] sm:$0xff]
    %v1164 = vld [vmem:[#allocation7 + $0x88] sm:$0xff]
    %v1165 = vld [vmem:[#allocation9] sm:$0xff]
    %v1166 = vld [vmem:[#allocation9 + $0x8] sm:$0x1]
    %v1169 = vlaneseq
    %v1170 = vshrl.u32 %v1169, 7
    %v1171 = vsub.s32 0, %v1170
    %v1172 = vrot.slane %v1165, %v1171
    %v1173 = vlaneseq
    %v1174 = vshrl.u32 %v1173, 7
    %v1175 = vsub.s32 1, %v1174
    %v1176 = vrot.slane %v1165, %v1175
    %v1177 = vlaneseq
    %v1178 = vshrl.u32 %v1177, 7
    %v1179 = vsub.s32 2, %v1178
    %v1180 = vrot.slane %v1165, %v1179
    %v1181 = vlaneseq
    %v1182 = vshrl.u32 %v1181, 7
    %v1183 = vsub.s32 3, %v1182
    %v1184 = vrot.slane %v1165, %v1183
    %v1185 = vlaneseq
    %v1186 = vshrl.u32 %v1185, 7
    %v1187 = vsub.s32 4, %v1186
    %v1188 = vrot.slane %v1165, %v1187
    %v1189 = vlaneseq
    %v1190 = vshrl.u32 %v1189, 7
    %v1191 = vsub.s32 5, %v1190
    %v1192 = vrot.slane %v1165, %v1191
    %v1193 = vlaneseq
    %v1194 = vshrl.u32 %v1193, 7
    %v1195 = vsub.s32 6, %v1194
    %v1196 = vrot.slane %v1165, %v1195
    %v1197 = vlaneseq
    %v1198 = vshrl.u32 %v1197, 7
    %v1199 = vsub.s32 7, %v1198
    %v1200 = vrot.slane %v1165, %v1199
    %v1201 = vlaneseq
    %v1202 = vshrl.u32 %v1201, 7
    %v1203 = vsub.s32 0, %v1202
    %v1204 = vrot.slane %v1166, %v1203
    %vm1214 = vcmask 130048
    %v1216 = vsel %vm1214, %v1146, 0
    %1218 = vmatprep.subr.mxu0 0.0
    %1219 = vmatpush1.msra.mxu0 0.0
    %1220 = vmatprep.subr.mxu0 0.0
    %1221 = vmatpush1.msra.mxu0 0.0
    %1222 = vmatprep.subr.mxu0 0.0
    %1223 = vmatpush1.msra.mxu0 0.0
    %1224 = vmatprep.subr.mxu0 0.0
    %1225 = vmatpush1.msra.mxu0 0.0
    %1226 = vmatprep.subr.mxu0 0.0
    %1227 = vmatpush1.msra.mxu0 0.0
    %1228 = vmatprep.subr.mxu0 0.0
    %1229 = vmatpush1.msra.mxu0 0.0
    %1230 = vmatprep.subr.mxu0 0.0
    %1231 = vmatpush1.msra.mxu0 0.0
    %1232 = vmatprep.subr.mxu0 0.0
    %1233 = vmatpush1.msra.mxu0 0.0
    %1234 = vmatprep.subr.mxu0 0.0
    %1235 = vmatpush1.msra.mxu0 0.0
    %1236 = vmatprep.subr.mxu0 0.0
    %1237 = vmatpush1.msra.mxu0 0.0
    %1238 = vmatprep.subr.mxu0 0.0
    %1239 = vmatpush1.msra.mxu0 0.0
    %1240 = vmatprep.subr.mxu0 0.0
    %1241 = vmatpush1.msra.mxu0 0.0
    %1242 = vmatprep.subr.mxu0 0.0
    %1243 = vmatpush1.msra.mxu0 0.0
    %1244 = vmatprep.subr.mxu0 0.0
    %1245 = vmatpush1.msra.mxu0 0.0
    %1246 = vmatprep.subr.mxu0 %v1157
    %1247 = vmatpush1.msra.mxu0 %v1156
    %1248 = vmatprep.subr.mxu0 %v1148
    %1249 = vmatpush1.msra.mxu0 %v1147
    %1250 = vmatprep.subr.mxu0 0.0
    %1251 = vmatpush2.msra.mxu0 0.0
    %1252 = vmatprep.subr.mxu0 0.0
    %1253 = vmatpush2.msra.mxu0 0.0
    %1254 = vmatprep.subr.mxu0 0.0
    %1255 = vmatpush2.msra.mxu0 0.0
    %1256 = vmatprep.subr.mxu0 0.0
    %1257 = vmatpush2.msra.mxu0 0.0
    %1258 = vmatprep.subr.mxu0 0.0
    %1259 = vmatpush2.msra.mxu0 0.0
    %1260 = vmatprep.subr.mxu0 0.0
    %1261 = vmatpush2.msra.mxu0 0.0
    %1262 = vmatprep.subr.mxu0 0.0
    %1263 = vmatpush2.msra.mxu0 0.0
    %1264 = vmatprep.subr.mxu0 0.0
    %1265 = vmatpush2.msra.mxu0 0.0
    %1266 = vmatprep.subr.mxu0 0.0
    %1267 = vmatpush2.msra.mxu0 0.0
    %1268 = vmatprep.subr.mxu0 0.0
    %1269 = vmatpush2.msra.mxu0 0.0
    %1270 = vmatprep.subr.mxu0 0.0
    %1271 = vmatpush2.msra.mxu0 0.0
    %1272 = vmatprep.subr.mxu0 0.0
    %1273 = vmatpush2.msra.mxu0 0.0
    %1274 = vmatprep.subr.mxu0 0.0
    %1275 = vmatpush2.msra.mxu0 0.0
    %1276 = vmatprep.subr.mxu0 0.0
    %1277 = vmatpush2.msra.mxu0 0.0
    %1278 = vmatprep.subr.mxu0 0.0
    %1279 = vmatpush2.msra.mxu0 0.0
    %1280 = vmatprep.subr.mxu0 0.0
    %1281 = vmatpush2.msra.mxu0 0.0
    %1282 = vmatprep.mubr.f32.mxu0 0.0
    %1283 = vmatmul.mubr.f32.gmra.mxu0 %v1216
    %v1284 = vpop.f32.mrf.mxu0
    %v1285 = vadd.f32 %v1172, %v1284
    %v1286 = vpop.f32.mrf.mxu0
    %v1287 = vadd.f32 %v1176, %v1286
    %1288 = vdwg.mxu0
    %1289 = vmatprep.subr.mxu0 0.0
    %1290 = vmatpush1.msra.mxu0 0.0
    %1291 = vmatprep.subr.mxu0 0.0
    %1292 = vmatpush1.msra.mxu0 0.0
    %1293 = vmatprep.subr.mxu0 0.0
    %1294 = vmatpush1.msra.mxu0 0.0
    %1295 = vmatprep.subr.mxu0 0.0
    %1296 = vmatpush1.msra.mxu0 0.0
    %1297 = vmatprep.subr.mxu0 0.0
    %1298 = vmatpush1.msra.mxu0 0.0
    %1299 = vmatprep.subr.mxu0 0.0
    %1300 = vmatpush1.msra.mxu0 0.0
    %1301 = vmatprep.subr.mxu0 0.0
    %1302 = vmatpush1.msra.mxu0 0.0
    %1303 = vmatprep.subr.mxu0 0.0
    %1304 = vmatpush1.msra.mxu0 0.0
    %1305 = vmatprep.subr.mxu0 0.0
    %1306 = vmatpush1.msra.mxu0 0.0
    %1307 = vmatprep.subr.mxu0 0.0
    %1308 = vmatpush1.msra.mxu0 0.0
    %1309 = vmatprep.subr.mxu0 0.0
    %1310 = vmatpush1.msra.mxu0 0.0
    %1311 = vmatprep.subr.mxu0 0.0
    %1312 = vmatpush1.msra.mxu0 0.0
    %1313 = vmatprep.subr.mxu0 0.0
    %1314 = vmatpush1.msra.mxu0 0.0
    %1315 = vmatprep.subr.mxu0 0.0
    %1316 = vmatpush1.msra.mxu0 0.0
    %1317 = vmatprep.subr.mxu0 %v1159
    %1318 = vmatpush1.msra.mxu0 %v1158
    %1319 = vmatprep.subr.mxu0 %v1150
    %1320 = vmatpush1.msra.mxu0 %v1149
    %1321 = vmatprep.subr.mxu0 0.0
    %1322 = vmatpush2.msra.mxu0 0.0
    %1323 = vmatprep.subr.mxu0 0.0
    %1324 = vmatpush2.msra.mxu0 0.0
    %1325 = vmatprep.subr.mxu0 0.0
    %1326 = vmatpush2.msra.mxu0 0.0
    %1327 = vmatprep.subr.mxu0 0.0
    %1328 = vmatpush2.msra.mxu0 0.0
    %1329 = vmatprep.subr.mxu0 0.0
    %1330 = vmatpush2.msra.mxu0 0.0
    %1331 = vmatprep.subr.mxu0 0.0
    %1332 = vmatpush2.msra.mxu0 0.0
    %1333 = vmatprep.subr.mxu0 0.0
    %1334 = vmatpush2.msra.mxu0 0.0
    %1335 = vmatprep.subr.mxu0 0.0
    %1336 = vmatpush2.msra.mxu0 0.0
    %1337 = vmatprep.subr.mxu0 0.0
    %1338 = vmatpush2.msra.mxu0 0.0
    %1339 = vmatprep.subr.mxu0 0.0
    %1340 = vmatpush2.msra.mxu0 0.0
    %1341 = vmatprep.subr.mxu0 0.0
    %1342 = vmatpush2.msra.mxu0 0.0
    %1343 = vmatprep.subr.mxu0 0.0
    %1344 = vmatpush2.msra.mxu0 0.0
    %1345 = vmatprep.subr.mxu0 0.0
    %1346 = vmatpush2.msra.mxu0 0.0
    %1347 = vmatprep.subr.mxu0 0.0
    %1348 = vmatpush2.msra.mxu0 0.0
    %1349 = vmatprep.subr.mxu0 0.0
    %1350 = vmatpush2.msra.mxu0 0.0
    %1351 = vmatprep.subr.mxu0 0.0
    %1352 = vmatpush2.msra.mxu0 0.0
    %1353 = vmatprep.mubr.f32.mxu0 0.0
    %1354 = vmatmul.mubr.f32.gmra.mxu0 %v1216
    %v1355 = vpop.f32.mrf.mxu0
    %v1356 = vadd.f32 %v1180, %v1355
    %v1357 = vpop.f32.mrf.mxu0
    %v1358 = vadd.f32 %v1184, %v1357
    %1359 = vdwg.mxu0
    %1360 = vmatprep.subr.mxu0 0.0
    %1361 = vmatpush1.msra.mxu0 0.0
    %1362 = vmatprep.subr.mxu0 0.0
    %1363 = vmatpush1.msra.mxu0 0.0
    %1364 = vmatprep.subr.mxu0 0.0
    %1365 = vmatpush1.msra.mxu0 0.0
    %1366 = vmatprep.subr.mxu0 0.0
    %1367 = vmatpush1.msra.mxu0 0.0
    %1368 = vmatprep.subr.mxu0 0.0
    %1369 = vmatpush1.msra.mxu0 0.0
    %1370 = vmatprep.subr.mxu0 0.0
    %1371 = vmatpush1.msra.mxu0 0.0
    %1372 = vmatprep.subr.mxu0 0.0
    %1373 = vmatpush1.msra.mxu0 0.0
    %1374 = vmatprep.subr.mxu0 0.0
    %1375 = vmatpush1.msra.mxu0 0.0
    %1376 = vmatprep.subr.mxu0 0.0
    %1377 = vmatpush1.msra.mxu0 0.0
    %1378 = vmatprep.subr.mxu0 0.0
    %1379 = vmatpush1.msra.mxu0 0.0
    %1380 = vmatprep.subr.mxu0 0.0
    %1381 = vmatpush1.msra.mxu0 0.0
    %1382 = vmatprep.subr.mxu0 0.0
    %1383 = vmatpush1.msra.mxu0 0.0
    %1384 = vmatprep.subr.mxu0 0.0
    %1385 = vmatpush1.msra.mxu0 0.0
    %1386 = vmatprep.subr.mxu0 0.0
    %1387 = vmatpush1.msra.mxu0 0.0
    %1388 = vmatprep.subr.mxu0 %v1161
    %1389 = vmatpush1.msra.mxu0 %v1160
    %1390 = vmatprep.subr.mxu0 %v1152
    %1391 = vmatpush1.msra.mxu0 %v1151
    %1392 = vmatprep.subr.mxu0 0.0
    %1393 = vmatpush2.msra.mxu0 0.0
    %1394 = vmatprep.subr.mxu0 0.0
    %1395 = vmatpush2.msra.mxu0 0.0
    %1396 = vmatprep.subr.mxu0 0.0
    %1397 = vmatpush2.msra.mxu0 0.0
    %1398 = vmatprep.subr.mxu0 0.0
    %1399 = vmatpush2.msra.mxu0 0.0
    %1400 = vmatprep.subr.mxu0 0.0
    %1401 = vmatpush2.msra.mxu0 0.0
    %1402 = vmatprep.subr.mxu0 0.0
    %1403 = vmatpush2.msra.mxu0 0.0
    %1404 = vmatprep.subr.mxu0 0.0
    %1405 = vmatpush2.msra.mxu0 0.0
    %1406 = vmatprep.subr.mxu0 0.0
    %1407 = vmatpush2.msra.mxu0 0.0
    %1408 = vmatprep.subr.mxu0 0.0
    %1409 = vmatpush2.msra.mxu0 0.0
    %1410 = vmatprep.subr.mxu0 0.0
    %1411 = vmatpush2.msra.mxu0 0.0
    %1412 = vmatprep.subr.mxu0 0.0
    %1413 = vmatpush2.msra.mxu0 0.0
    %1414 = vmatprep.subr.mxu0 0.0
    %1415 = vmatpush2.msra.mxu0 0.0
    %1416 = vmatprep.subr.mxu0 0.0
    %1417 = vmatpush2.msra.mxu0 0.0
    %1418 = vmatprep.subr.mxu0 0.0
    %1419 = vmatpush2.msra.mxu0 0.0
    %1420 = vmatprep.subr.mxu0 0.0
    %1421 = vmatpush2.msra.mxu0 0.0
    %1422 = vmatprep.subr.mxu0 0.0
    %1423 = vmatpush2.msra.mxu0 0.0
    %1424 = vmatprep.mubr.f32.mxu0 0.0
    %1425 = vmatmul.mubr.f32.gmra.mxu0 %v1216
    %v1426 = vpop.f32.mrf.mxu0
    %v1427 = vadd.f32 %v1188, %v1426
    %v1428 = vpop.f32.mrf.mxu0
    %v1429 = vadd.f32 %v1192, %v1428
    %1430 = vdwg.mxu0
    %1431 = vmatprep.subr.mxu0 0.0
    %1432 = vmatpush1.msra.mxu0 0.0
    %1433 = vmatprep.subr.mxu0 0.0
    %1434 = vmatpush1.msra.mxu0 0.0
    %1435 = vmatprep.subr.mxu0 0.0
    %1436 = vmatpush1.msra.mxu0 0.0
    %1437 = vmatprep.subr.mxu0 0.0
    %1438 = vmatpush1.msra.mxu0 0.0
    %1439 = vmatprep.subr.mxu0 0.0
    %1440 = vmatpush1.msra.mxu0 0.0
    %1441 = vmatprep.subr.mxu0 0.0
    %1442 = vmatpush1.msra.mxu0 0.0
    %1443 = vmatprep.subr.mxu0 0.0
    %1444 = vmatpush1.msra.mxu0 0.0
    %1445 = vmatprep.subr.mxu0 0.0
    %1446 = vmatpush1.msra.mxu0 0.0
    %1447 = vmatprep.subr.mxu0 0.0
    %1448 = vmatpush1.msra.mxu0 0.0
    %1449 = vmatprep.subr.mxu0 0.0
    %1450 = vmatpush1.msra.mxu0 0.0
    %1451 = vmatprep.subr.mxu0 0.0
    %1452 = vmatpush1.msra.mxu0 0.0
    %1453 = vmatprep.subr.mxu0 0.0
    %1454 = vmatpush1.msra.mxu0 0.0
    %1455 = vmatprep.subr.mxu0 0.0
    %1456 = vmatpush1.msra.mxu0 0.0
    %1457 = vmatprep.subr.mxu0 0.0
    %1458 = vmatpush1.msra.mxu0 0.0
    %1459 = vmatprep.subr.mxu0 %v1163
    %1460 = vmatpush1.msra.mxu0 %v1162
    %1461 = vmatprep.subr.mxu0 %v1154
    %1462 = vmatpush1.msra.mxu0 %v1153
    %1463 = vmatprep.subr.mxu0 0.0
    %1464 = vmatpush2.msra.mxu0 0.0
    %1465 = vmatprep.subr.mxu0 0.0
    %1466 = vmatpush2.msra.mxu0 0.0
    %1467 = vmatprep.subr.mxu0 0.0
    %1468 = vmatpush2.msra.mxu0 0.0
    %1469 = vmatprep.subr.mxu0 0.0
    %1470 = vmatpush2.msra.mxu0 0.0
    %1471 = vmatprep.subr.mxu0 0.0
    %1472 = vmatpush2.msra.mxu0 0.0
    %1473 = vmatprep.subr.mxu0 0.0
    %1474 = vmatpush2.msra.mxu0 0.0
    %1475 = vmatprep.subr.mxu0 0.0
    %1476 = vmatpush2.msra.mxu0 0.0
    %1477 = vmatprep.subr.mxu0 0.0
    %1478 = vmatpush2.msra.mxu0 0.0
    %1479 = vmatprep.subr.mxu0 0.0
    %1480 = vmatpush2.msra.mxu0 0.0
    %1481 = vmatprep.subr.mxu0 0.0
    %1482 = vmatpush2.msra.mxu0 0.0
    %1483 = vmatprep.subr.mxu0 0.0
    %1484 = vmatpush2.msra.mxu0 0.0
    %1485 = vmatprep.subr.mxu0 0.0
    %1486 = vmatpush2.msra.mxu0 0.0
    %1487 = vmatprep.subr.mxu0 0.0
    %1488 = vmatpush2.msra.mxu0 0.0
    %1489 = vmatprep.subr.mxu0 0.0
    %1490 = vmatpush2.msra.mxu0 0.0
    %1491 = vmatprep.subr.mxu0 0.0
    %1492 = vmatpush2.msra.mxu0 0.0
    %1493 = vmatprep.subr.mxu0 0.0
    %1494 = vmatpush2.msra.mxu0 0.0
    %1495 = vmatprep.mubr.f32.mxu0 0.0
    %1496 = vmatmul.mubr.f32.gmra.mxu0 %v1216
    %v1497 = vpop.f32.mrf.mxu0
    %v1498 = vadd.f32 %v1196, %v1497
    %v1499 = vpop.f32.mrf.mxu0
    %v1500 = vadd.f32 %v1200, %v1499
    %1501 = vdwg.mxu0
    %1502 = vmatprep.subr.mxu0 0.0
    %1503 = vmatpush1.msra.mxu0 0.0
    %1504 = vmatprep.subr.mxu0 0.0
    %1505 = vmatpush1.msra.mxu0 0.0
    %1506 = vmatprep.subr.mxu0 0.0
    %1507 = vmatpush1.msra.mxu0 0.0
    %1508 = vmatprep.subr.mxu0 0.0
    %1509 = vmatpush1.msra.mxu0 0.0
    %1510 = vmatprep.subr.mxu0 0.0
    %1511 = vmatpush1.msra.mxu0 0.0
    %1512 = vmatprep.subr.mxu0 0.0
    %1513 = vmatpush1.msra.mxu0 0.0
    %1514 = vmatprep.subr.mxu0 0.0
    %1515 = vmatpush1.msra.mxu0 0.0
    %1516 = vmatprep.subr.mxu0 0.0
    %1517 = vmatpush1.msra.mxu0 0.0
    %1518 = vmatprep.subr.mxu0 0.0
    %1519 = vmatpush1.msra.mxu0 0.0
    %1520 = vmatprep.subr.mxu0 0.0
    %1521 = vmatpush1.msra.mxu0 0.0
    %1522 = vmatprep.subr.mxu0 0.0
    %1523 = vmatpush1.msra.mxu0 0.0
    %1524 = vmatprep.subr.mxu0 0.0
    %1525 = vmatpush1.msra.mxu0 0.0
    %1526 = vmatprep.subr.mxu0 0.0
    %1527 = vmatpush1.msra.mxu0 0.0
    %1528 = vmatprep.subr.mxu0 0.0
    %1529 = vmatpush1.msra.mxu0 0.0
    %1530 = vmatprep.subr.mxu0 0.0
    %1531 = vmatpush1.msra.mxu0 %v1164
    %1532 = vmatprep.subr.mxu0 0.0
    %1533 = vmatpush1.msra.mxu0 %v1155
    %1534 = vmatprep.subr.mxu0 0.0
    %1535 = vmatpush2.msra.mxu0 0.0
    %1536 = vmatprep.subr.mxu0 0.0
    %1537 = vmatpush2.msra.mxu0 0.0
    %1538 = vmatprep.subr.mxu0 0.0
    %1539 = vmatpush2.msra.mxu0 0.0
    %1540 = vmatprep.subr.mxu0 0.0
    %1541 = vmatpush2.msra.mxu0 0.0
    %1542 = vmatprep.subr.mxu0 0.0
    %1543 = vmatpush2.msra.mxu0 0.0
    %1544 = vmatprep.subr.mxu0 0.0
    %1545 = vmatpush2.msra.mxu0 0.0
    %1546 = vmatprep.subr.mxu0 0.0
    %1547 = vmatpush2.msra.mxu0 0.0
    %1548 = vmatprep.subr.mxu0 0.0
    %1549 = vmatpush2.msra.mxu0 0.0
    %1550 = vmatprep.subr.mxu0 0.0
    %1551 = vmatpush2.msra.mxu0 0.0
    %1552 = vmatprep.subr.mxu0 0.0
    %1553 = vmatpush2.msra.mxu0 0.0
    %1554 = vmatprep.subr.mxu0 0.0
    %1555 = vmatpush2.msra.mxu0 0.0
    %1556 = vmatprep.subr.mxu0 0.0
    %1557 = vmatpush2.msra.mxu0 0.0
    %1558 = vmatprep.subr.mxu0 0.0
    %1559 = vmatpush2.msra.mxu0 0.0
    %1560 = vmatprep.subr.mxu0 0.0
    %1561 = vmatpush2.msra.mxu0 0.0
    %1562 = vmatprep.subr.mxu0 0.0
    %1563 = vmatpush2.msra.mxu0 0.0
    %1564 = vmatprep.subr.mxu0 0.0
    %1565 = vmatpush2.msra.mxu0 0.0
    %1566 = vmatprep.mubr.f32.mxu0 0.0
    %1567 = vmatmul.mubr.f32.gmra.mxu0 %v1216
    %v1568 = vpop.f32.mrf.mxu0
    %v1569 = vadd.f32 %v1204, %v1568
    %v1570 = vpop.f32.mrf.mxu0
    %1571 = vdwg.mxu0
    %v1581 = vcombine.low %v1285, %v1287
    %v1582 = vcombine.low %v1356, %v1358
    %v1584 = vunpack.c.l.s4 1983009808
    %v1585 = vunpack.c.0.s8 %v1584
    %v1586 = vlaneseq
    %v1587 = vshrl.u32 %v1586, 7
    %v1588 = vsub.s32 %v1585, %v1587
    %v1589 = vrot.slane %v1581, %v1588
    %v1591 = vunpack.c.l.s4 1983009808
    %v1592 = vunpack.c.0.s8 %v1591
    %v1593 = vlaneseq
    %v1594 = vshrl.u32 %v1593, 7
    %v1595 = vsub.s32 %v1592, %v1594
    %v1596 = vrot.slane %v1582, %v1595
    %v1597 = vcombine.low %v1589, %v1596
    %v1598 = vcombine.low %v1427, %v1429
    %v1599 = vcombine.low %v1498, %v1500
    %v1601 = vunpack.c.l.s4 1983009808
    %v1602 = vunpack.c.0.s8 %v1601
    %v1603 = vlaneseq
    %v1604 = vshrl.u32 %v1603, 7
    %v1605 = vsub.s32 %v1602, %v1604
    %v1606 = vrot.slane %v1598, %v1605
    %v1608 = vunpack.c.l.s4 1983009808
    %v1609 = vunpack.c.0.s8 %v1608
    %v1610 = vlaneseq
    %v1611 = vshrl.u32 %v1610, 7
    %v1612 = vsub.s32 %v1609, %v1611
    %v1613 = vrot.slane %v1599, %v1612
    %v1614 = vcombine.low %v1606, %v1613
    %v1616 = vunpack.c.l.s4 1983009808
    %v1617 = vunpack.c.0.s8 %v1616
    %v1618 = vlaneseq
    %v1619 = vshrl.u32 %v1618, 7
    %v1620 = vsub.s32 %v1617, %v1619
    %v1621 = vrot.slane %v1569, %v1620
    %1625 = vst [vmem:[#allocation10] sm:$0xff] %v1597
    %1626 = vst [vmem:[#allocation10 + $0x8] sm:$0xff] %v1614
    %1627 = vst [vmem:[#allocation10 + $0x10] sm:$0x3] %v1621
    // Predicated region
    $region34: #{tpu_custom_call.1} parent=1 // pred_check
      _
    $region35: #{tpu_custom_call.1} parent=1 // pred_check_branch
      %1629 = sbr.rel (0) target = $region37
    $region36: #{tpu_custom_call.1} parent=1 // pred_region
      %s1631 = ssub.s32 288, 288
      %1632 = vsyncadd [#allocation4], %s1631
      %s1634 = sshll.u32 [#allocation10], 4
      %s1635 = int_to_ptr.vmem [resolvable:$true] %s1634
      %1637 = dma.vmem_to_hbm [thread:$0]  %s1635, 288, %s4, [#allocation4]
    $region37: #{tpu_custom_call.1} parent=1 // pred_fallthru
      _
    // Predicated region
    $region38: #{tpu_custom_call.1} parent=1 // pred_check
      _
    $region39: #{tpu_custom_call.1} parent=1 // pred_check_branch
      %1639 = sbr.rel (0) target = $region41
    $region40: #{tpu_custom_call.1} parent=1 // pred_region
      %1640 = dma.done [#allocation4], 288
    $region41: #{tpu_custom_call.1} parent=1 // pred_fallthru
      _
    %1641 = vsyncpa [#allocation3], 1
    %1642 = vsyncpa [#allocation8], 1
    %1643 = vsyncpa [#allocation4], 1
    %1644 = vsyncpa [#allocation5], 1

</llo_original>
